<compile_context>
chip_gen: v7x
topology: tpu7x:2x2x1
jax: 0.10.0
libtpu: 0.0.40
codegen_flags: <defaults>
</compile_context>

<pallas_src>
import functools

import jax
import jax.numpy as jnp
from jax.experimental import pallas as pl
from jax.experimental.pallas import tpu as pltpu

LANE = 128


def _round_up(x, m):
    return ((x + m - 1) // m) * m


def _pad2d(x, rows, cols):
    r, c = x.shape
    return jnp.pad(x, ((0, rows - r), (0, cols - c)))


# ---------------------------------------------------------------------------
# Fused kernel body (one N-tile per grid step).
# Ref order: u0, [bw_j, bb_j]*n_branch, gT_tile, [twT_j, tb_j]*n_trunk, out.
# ---------------------------------------------------------------------------
def _deeponet_fused_kernel(*refs, n_branch, n_trunk):
    idx = 0
    u0_ref = refs[idx]; idx += 1
    branch_refs = refs[idx:idx + 2 * n_branch]; idx += 2 * n_branch
    gT_ref = refs[idx]; idx += 1
    trunk_refs = refs[idx:idx + 2 * n_trunk]; idx += 2 * n_trunk
    o_ref = refs[idx]

    # --- branch MLP (row layout), recomputed per tile (tiny; a pid==0 hoist
    #     would break under "parallel" megacore sharding):
    #     a = tanh(...relu(u0 @ W + b)...)                     -> (B, Pp) f32
    x = u0_ref[...]
    for j in range(n_branch):
        w = branch_refs[2 * j][...]                 # bf16 (in_p, out_p)
        b = branch_refs[2 * j + 1][...]             # f32  (1, out_p)
        x = jnp.dot(x.astype(w.dtype), w,
                    preferred_element_type=jnp.float32) + b
        x = jnp.maximum(x, 0.0) if j != n_branch - 1 else jnp.tanh(x)
    a = x                                           # (B, Pp) f32

    # --- trunk MLP computed transposed so the final matmul is canonical and
    #     the (B, Nt) output tile is lane-dense:
    #     y = tanh(...relu(W.T @ grid_tile.T + b[:, None])...) -> (Pp, Nt) f32
    y = gT_ref[...]
    for j in range(n_trunk):
        wT = trunk_refs[2 * j][...]                 # bf16 (out_p, in_p)
        bc = trunk_refs[2 * j + 1][...]             # f32  (out_p, 1)
        y = jnp.dot(wT, y.astype(wT.dtype),
                    preferred_element_type=jnp.float32) + bc
        y = jnp.maximum(y, 0.0) if j != n_trunk - 1 else jnp.tanh(y)

    # --- contraction: einsum('bi,ni->bn') == a @ trunk.T == a @ y -> (B, Nt)
    #     bf16 MXU inputs, f32 accumulate.
    o_ref[...] = jnp.dot(a.astype(jnp.bfloat16), y.astype(jnp.bfloat16),
                         preferred_element_type=jnp.float32).astype(o_ref.dtype)


# ---------------------------------------------------------------------------
# One-time parameter packing (pad to lane-dense shapes, transpose trunk,
# cast weights to the MXU dtype).  Hoisted out of the per-call path.
# ---------------------------------------------------------------------------
def _pack_branch(branch_params, mxu_dtype):
    ops = []
    for j, (w, b) in enumerate(branch_params):
        k_pad = w.shape[0] if j == 0 else _round_up(w.shape[0], LANE)
        n_pad = _round_up(w.shape[1], LANE)
        ops.append(_pad2d(w, k_pad, n_pad).astype(mxu_dtype))            # (in_p, out_p)
        ops.append(_pad2d(b.reshape(1, -1), 1, n_pad).astype(jnp.float32))  # (1, out_p)
    return ops


def _pack_trunk(trunk_params, mxu_dtype):
    ops = []
    for j, (w, b) in enumerate(trunk_params):
        k_pad = w.shape[0] if j == 0 else _round_up(w.shape[0], LANE)
        n_pad = _round_up(w.shape[1], LANE)
        ops.append(_pad2d(w.T, n_pad, k_pad).astype(mxu_dtype))          # (out_p, in_p)
        ops.append(_pad2d(b.reshape(-1, 1), n_pad, 1).astype(jnp.float32))  # (out_p, 1)
    return ops


# ---------------------------------------------------------------------------
# Forward builder.  Padded/transposed/bf16 weights are baked in once; the
# returned jitted forward only pads/transposes the query grid per call.
# ---------------------------------------------------------------------------
def make_deeponet_forward(branch_params, trunk_params, *, tile_n=512,
                          mxu_dtype=jnp.bfloat16):
    n_branch = len(branch_params)
    n_trunk = len(trunk_params)
    p_branch = branch_params[-1][0].shape[1]
    p_trunk = trunk_params[-1][0].shape[1]
    assert p_branch == p_trunk, "branch and trunk output widths must match"
    Pp = _round_up(p_branch, LANE)

    branch_ops = _pack_branch(branch_params, mxu_dtype)
    trunk_ops = _pack_trunk(trunk_params, mxu_dtype)

    @jax.jit
    def forward(u0, grid_pts):
        B, d_in = u0.shape
        N, t_in = grid_pts.shape

        # N tiling: lane-dense tiles of width Nt; Np is a multiple of Nt.
        Np = _round_up(N, LANE)
        Nt = Np if Np <= tile_n else tile_n
        Np = _round_up(Np, Nt)
        n_tiles = Np // Nt

        # Trunk input transposed (t_in, Np): lane-dense along N.
        gT = _pad2d(grid_pts.T, t_in, Np).astype(mxu_dtype)
        u0_c = u0.astype(mxu_dtype)

        operands = [u0_c, *branch_ops, gT, *trunk_ops]

        in_specs = [pl.BlockSpec(u0_c.shape, lambda i: (0, 0))]
        in_specs += [pl.BlockSpec(op.shape, lambda i: (0, 0)) for op in branch_ops]
        in_specs += [pl.BlockSpec((t_in, Nt), lambda i: (0, i))]
        in_specs += [pl.BlockSpec(op.shape, lambda i: (0, 0)) for op in trunk_ops]
        out_specs = pl.BlockSpec((B, Nt), lambda i: (0, i))

        # Advisory cost estimate (whole call).
        flops = 2 * B * Pp * Np                      # final contraction
        k = d_in
        for w, _ in branch_params:
            n_out = _round_up(w.shape[1], LANE)
            flops += 2 * B * k * n_out * n_tiles     # branch recomputed per tile
            k = n_out
        k = t_in
        for w, _ in trunk_params:
            n_out = _round_up(w.shape[1], LANE)
            flops += 2 * Np * k * n_out
            k = n_out
        transcendentals = B * Pp * n_tiles + Pp * Np
        bytes_accessed = int(sum(int(op.size) * op.dtype.itemsize for op in operands)
                             + B * Np * 4)

        out_padded = pl.pallas_call(
            functools.partial(_deeponet_fused_kernel,
                              n_branch=n_branch, n_trunk=n_trunk),
            out_shape=jax.ShapeDtypeStruct((B, Np), jnp.float32),
            grid=(n_tiles,),
            in_specs=in_specs,
            out_specs=out_specs,
            compiler_params=pltpu.CompilerParams(
                dimension_semantics=("parallel",)),   # v7x megacore over N-tiles
            cost_estimate=pl.CostEstimate(flops=int(flops),
                                          transcendentals=int(transcendentals),
                                          bytes_accessed=bytes_accessed),
        )(*operands)

        return out_padded[:, :N]

    return forward


# ---------------------------------------------------------------------------
# DenseNet parameter init, matching PyTorch nn.Linear defaults.
# ---------------------------------------------------------------------------
def init_dense_params(key, layers):
    """PyTorch nn.Linear default init: U(-1/sqrt(fan_in), 1/sqrt(fan_in))."""
    params = []
    for j in range(len(layers) - 1):
        fan_in, fan_out = layers[j], layers[j + 1]
        key, kw, kb = jax.random.split(key, 3)
        bound = 1.0 / jnp.sqrt(jnp.float32(fan_in))
        w = jax.random.uniform(kw, (fan_in, fan_out), jnp.float32, -bound, bound)
        b = jax.random.uniform(kb, (fan_out,), jnp.float32, -bound, bound)
        params.append((w, b))
    return params, key


# ---------------------------------------------------------------------------
if __name__ == "__main__":
    # Small, DeepONet-consistent shapes (N chosen so the N-tile grid has >1 step).
    B = 8                          # batch of input functions
    N = 1000                       # query points -> Np=1024, two 512-lane tiles
    branch_layer = [16, 32, 32]    # branch MLP: 16 -> 32 -> 32  (p = 32)
    trunk_layer = [2, 32, 32]      # trunk  MLP:  2 -> 32 -> 32  (p = 32)

    key = jax.random.PRNGKey(0)
    branch_params, key = init_dense_params(key, branch_layer)
    trunk_params, key = init_dense_params(key, trunk_layer)

    key, ku, kg = jax.random.split(key, 3)
    u0 = jax.random.normal(ku, (B, branch_layer[0]), jnp.float32)
    grid = jax.random.uniform(kg, (N, trunk_layer[0]), jnp.float32)

    forward = make_deeponet_forward(branch_params, trunk_params, tile_n=512)
    out = jax.block_until_ready(forward(u0, grid))

    assert out.shape == (B, N), out.shape
    assert out.dtype == jnp.float32

    # Sanity check against a plain-JAX f32 reference of the same math
    # (tolerance loosened because the kernel uses bf16 MXU inputs).
    def ref_dense(x, params):
        for j, (w, b) in enumerate(params):
            x = x @ w + b
            x = jnp.maximum(x, 0.0) if j != len(params) - 1 else jnp.tanh(x)
        return x

    ref = jnp.einsum('bi,ni->bn',
                     ref_dense(u0, branch_params),
                     ref_dense(grid, trunk_params))
    rel_err = float(jnp.max(jnp.abs(out - ref)) /
                    (jnp.max(jnp.abs(ref)) + 1e-6))
    assert rel_err < 5e-2, rel_err

    print("KERNEL_OK")
</pallas_src>

<mosaic_0001>
module attributes {stable_mosaic.version = 11 : i64} {
  func.func @_deeponet_fused_kernel(%arg0: i32, %arg1: memref<8x16xbf16, #tpu.memory_space<vmem>>, %arg2: memref<16x128xbf16, #tpu.memory_space<vmem>>, %arg3: memref<1x128xf32, #tpu.memory_space<vmem>>, %arg4: memref<128x128xbf16, #tpu.memory_space<vmem>>, %arg5: memref<1x128xf32, #tpu.memory_space<vmem>>, %arg6: memref<2x512xbf16, #tpu.memory_space<vmem>>, %arg7: memref<128x2xbf16, #tpu.memory_space<vmem>>, %arg8: memref<128x1xf32, #tpu.memory_space<vmem>>, %arg9: memref<128x128xbf16, #tpu.memory_space<vmem>>, %arg10: memref<128x1xf32, #tpu.memory_space<vmem>>, %arg11: memref<8x512xf32, #tpu.memory_space<vmem>>) attributes {dimension_semantics = [#tpu.dimension_semantics<parallel>], iteration_bounds = array<i64: 2>, scalar_prefetch = 0 : i64, scratch_operands = 0 : i64, tpu.core_type = #tpu.core_type<tc>, window_params = [{pipeline_mode = #tpu.pipeline_mode<synchronous>, transform_indices = @transform_0, window_bounds = array<i64: 8, 16>}, {pipeline_mode = #tpu.pipeline_mode<synchronous>, transform_indices = @transform_1, window_bounds = array<i64: 16, 128>}, {pipeline_mode = #tpu.pipeline_mode<synchronous>, transform_indices = @transform_2, window_bounds = array<i64: 1, 128>}, {pipeline_mode = #tpu.pipeline_mode<synchronous>, transform_indices = @transform_3, window_bounds = array<i64: 128, 128>}, {pipeline_mode = #tpu.pipeline_mode<synchronous>, transform_indices = @transform_4, window_bounds = array<i64: 1, 128>}, {transform_indices = @transform_5, window_bounds = array<i64: 2, 512>}, {pipeline_mode = #tpu.pipeline_mode<synchronous>, transform_indices = @transform_6, window_bounds = array<i64: 128, 2>}, {pipeline_mode = #tpu.pipeline_mode<synchronous>, transform_indices = @transform_7, window_bounds = array<i64: 128, 1>}, {pipeline_mode = #tpu.pipeline_mode<synchronous>, transform_indices = @transform_8, window_bounds = array<i64: 128, 128>}, {pipeline_mode = #tpu.pipeline_mode<synchronous>, transform_indices = @transform_9, window_bounds = array<i64: 128, 1>}, {transform_indices = @transform_10, window_bounds = array<i64: 8, 512>}]} {
    %c0 = arith.constant 0 : index
    %c0_0 = arith.constant 0 : index
    %0 = vector.load %arg1[%c0, %c0_0] : memref<8x16xbf16, #tpu.memory_space<vmem>>, vector<8x16xbf16>
    %c0_1 = arith.constant 0 : index
    %c0_2 = arith.constant 0 : index
    %1 = vector.load %arg2[%c0_1, %c0_2] : memref<16x128xbf16, #tpu.memory_space<vmem>>, vector<16x128xbf16>
    %c0_3 = arith.constant 0 : index
    %c0_4 = arith.constant 0 : index
    %2 = vector.load %arg3[%c0_3, %c0_4] : memref<1x128xf32, #tpu.memory_space<vmem>>, vector<1x128xf32>
    %cst = arith.constant dense<0.000000e+00> : vector<8x128xf32>
    %3 = tpu.matmul %0, %1, %cst {dimension_numbers = #tpu.dot_dimension_numbers<[1], [0], [0], [1], [0, 0, 1, 1], [], []>} : vector<8x16xbf16>, vector<16x128xbf16>, vector<8x128xf32> -> vector<8x128xf32>
    %4 = vector.broadcast %2 : vector<1x128xf32> to vector<8x128xf32>
    %5 = arith.addf %3, %4 : vector<8x128xf32>
    %cst_5 = arith.constant 0.000000e+00 : f32
    %6 = vector.broadcast %cst_5 : f32 to vector<8x128xf32>
    %7 = arith.maximumf %5, %6 : vector<8x128xf32>
    %c0_6 = arith.constant 0 : index
    %c0_7 = arith.constant 0 : index
    %8 = vector.load %arg4[%c0_6, %c0_7] : memref<128x128xbf16, #tpu.memory_space<vmem>>, vector<128x128xbf16>
    %c0_8 = arith.constant 0 : index
    %c0_9 = arith.constant 0 : index
    %9 = vector.load %arg5[%c0_8, %c0_9] : memref<1x128xf32, #tpu.memory_space<vmem>>, vector<1x128xf32>
    %10 = arith.truncf %7 : vector<8x128xf32> to vector<8x128xbf16>
    %cst_10 = arith.constant dense<0.000000e+00> : vector<8x128xf32>
    %11 = tpu.matmul %10, %8, %cst_10 {dimension_numbers = #tpu.dot_dimension_numbers<[1], [0], [0], [1], [0, 0, 1, 1], [], []>} : vector<8x128xbf16>, vector<128x128xbf16>, vector<8x128xf32> -> vector<8x128xf32>
    %12 = vector.broadcast %9 : vector<1x128xf32> to vector<8x128xf32>
    %13 = arith.addf %11, %12 : vector<8x128xf32>
    %14 = math.tanh %13 : vector<8x128xf32>
    %c0_11 = arith.constant 0 : index
    %c0_12 = arith.constant 0 : index
    %15 = vector.load %arg6[%c0_11, %c0_12] : memref<2x512xbf16, #tpu.memory_space<vmem>>, vector<2x512xbf16>
    %c0_13 = arith.constant 0 : index
    %c0_14 = arith.constant 0 : index
    %16 = vector.load %arg7[%c0_13, %c0_14] : memref<128x2xbf16, #tpu.memory_space<vmem>>, vector<128x2xbf16>
    %c0_15 = arith.constant 0 : index
    %c0_16 = arith.constant 0 : index
    %17 = vector.load %arg8[%c0_15, %c0_16] : memref<128x1xf32, #tpu.memory_space<vmem>>, vector<128x1xf32>
    %cst_17 = arith.constant dense<0.000000e+00> : vector<128x512xf32>
    %18 = tpu.matmul %16, %15, %cst_17 {dimension_numbers = #tpu.dot_dimension_numbers<[1], [0], [0], [1], [0, 0, 1, 1], [], []>} : vector<128x2xbf16>, vector<2x512xbf16>, vector<128x512xf32> -> vector<128x512xf32>
    %19 = vector.broadcast %17 : vector<128x1xf32> to vector<128x512xf32>
    %20 = arith.addf %18, %19 : vector<128x512xf32>
    %cst_18 = arith.constant 0.000000e+00 : f32
    %21 = vector.broadcast %cst_18 : f32 to vector<128x512xf32>
    %22 = arith.maximumf %20, %21 : vector<128x512xf32>
    %c0_19 = arith.constant 0 : index
    %c0_20 = arith.constant 0 : index
    %23 = vector.load %arg9[%c0_19, %c0_20] : memref<128x128xbf16, #tpu.memory_space<vmem>>, vector<128x128xbf16>
    %c0_21 = arith.constant 0 : index
    %c0_22 = arith.constant 0 : index
    %24 = vector.load %arg10[%c0_21, %c0_22] : memref<128x1xf32, #tpu.memory_space<vmem>>, vector<128x1xf32>
    %25 = arith.truncf %22 : vector<128x512xf32> to vector<128x512xbf16>
    %cst_23 = arith.constant dense<0.000000e+00> : vector<128x512xf32>
    %26 = tpu.matmul %23, %25, %cst_23 {dimension_numbers = #tpu.dot_dimension_numbers<[1], [0], [0], [1], [0, 0, 1, 1], [], []>} : vector<128x128xbf16>, vector<128x512xbf16>, vector<128x512xf32> -> vector<128x512xf32>
    %27 = vector.broadcast %24 : vector<128x1xf32> to vector<128x512xf32>
    %28 = arith.addf %26, %27 : vector<128x512xf32>
    %29 = math.tanh %28 : vector<128x512xf32>
    %30 = arith.truncf %14 : vector<8x128xf32> to vector<8x128xbf16>
    %31 = arith.truncf %29 : vector<128x512xf32> to vector<128x512xbf16>
    %cst_24 = arith.constant dense<0.000000e+00> : vector<8x512xf32>
    %32 = tpu.matmul %30, %31, %cst_24 {dimension_numbers = #tpu.dot_dimension_numbers<[1], [0], [0], [1], [0, 0, 1, 1], [], []>} : vector<8x128xbf16>, vector<128x512xbf16>, vector<8x512xf32> -> vector<8x512xf32>
    %c0_25 = arith.constant 0 : index
    %c0_26 = arith.constant 0 : index
    %33 = vector.load %arg11[%c0_25, %c0_26] : memref<8x512xf32, #tpu.memory_space<vmem>>, vector<8x512xf32>
    tpu.vector_store %arg11[%c0_25, %c0_26], %32 {strides = array<i32>} : memref<8x512xf32, #tpu.memory_space<vmem>>, vector<8x512xf32>,
    return
  }
  func.func @transform_0(%arg0: i32) -> (i32, i32) {
    %c0_i32 = arith.constant 0 : i32
    %c0_i32_0 = arith.constant 0 : i32
    %c0_i32_1 = arith.constant 0 : i32
    return %c0_i32, %c0_i32_0 : i32, i32
  }
  func.func @transform_1(%arg0: i32) -> (i32, i32) {
    %c0_i32 = arith.constant 0 : i32
    %c0_i32_0 = arith.constant 0 : i32
    %c0_i32_1 = arith.constant 0 : i32
    return %c0_i32, %c0_i32_0 : i32, i32
  }
  func.func @transform_2(%arg0: i32) -> (i32, i32) {
    %c0_i32 = arith.constant 0 : i32
    %c0_i32_0 = arith.constant 0 : i32
    %c0_i32_1 = arith.constant 0 : i32
    return %c0_i32, %c0_i32_0 : i32, i32
  }
  func.func @transform_3(%arg0: i32) -> (i32, i32) {
    %c0_i32 = arith.constant 0 : i32
    %c0_i32_0 = arith.constant 0 : i32
    %c0_i32_1 = arith.constant 0 : i32
    return %c0_i32, %c0_i32_0 : i32, i32
  }
  func.func @transform_4(%arg0: i32) -> (i32, i32) {
    %c0_i32 = arith.constant 0 : i32
    %c0_i32_0 = arith.constant 0 : i32
    %c0_i32_1 = arith.constant 0 : i32
    return %c0_i32, %c0_i32_0 : i32, i32
  }
  func.func @transform_5(%arg0: i32) -> (i32, i32) {
    %c0_i32 = arith.constant 0 : i32
    %c0_i32_0 = arith.constant 0 : i32
    return %c0_i32, %arg0 : i32, i32
  }
  func.func @transform_6(%arg0: i32) -> (i32, i32) {
    %c0_i32 = arith.constant 0 : i32
    %c0_i32_0 = arith.constant 0 : i32
    %c0_i32_1 = arith.constant 0 : i32
    return %c0_i32, %c0_i32_0 : i32, i32
  }
  func.func @transform_7(%arg0: i32) -> (i32, i32) {
    %c0_i32 = arith.constant 0 : i32
    %c0_i32_0 = arith.constant 0 : i32
    %c0_i32_1 = arith.constant 0 : i32
    return %c0_i32, %c0_i32_0 : i32, i32
  }
  func.func @transform_8(%arg0: i32) -> (i32, i32) {
    %c0_i32 = arith.constant 0 : i32
    %c0_i32_0 = arith.constant 0 : i32
    %c0_i32_1 = arith.constant 0 : i32
    return %c0_i32, %c0_i32_0 : i32, i32
  }
  func.func @transform_9(%arg0: i32) -> (i32, i32) {
    %c0_i32 = arith.constant 0 : i32
    %c0_i32_0 = arith.constant 0 : i32
    %c0_i32_1 = arith.constant 0 : i32
    return %c0_i32, %c0_i32_0 : i32, i32
  }
  func.func @transform_10(%arg0: i32) -> (i32, i32) {
    %c0_i32 = arith.constant 0 : i32
    %c0_i32_0 = arith.constant 0 : i32
    return %c0_i32, %arg0 : i32, i32
  }
}

</mosaic_0001>

<llo_original>
// kernel: forward.1
$region0: #{forward.1}
  #allocation0 [shape = 'u32[]', space=smem, size = 0x4, offset = 0x4, fixed_abs, tag = 'smem constant byte address 0x4 - core index']
  #allocation1 [shape = 'u32[144,128]{1,0:T(1,128)}', space=vmem, size = 0x12000, scoped, tag = 'internal scratch']
  %s0 = inlined_call_operand.vmem [shape: bf16[8,16], index: 0, kind: input, shape index: {}]
  %s1 = inlined_call_operand.vmem [shape: bf16[16,128], index: 1, kind: input, shape index: {}]
  %s2 = inlined_call_operand.vmem [shape: f32[1,128], index: 2, kind: input, shape index: {}]
  %s3 = inlined_call_operand.hbm [shape: bf16[128,128], index: 3, kind: input, shape index: {}]
  %s4 = inlined_call_operand.vmem [shape: f32[1,128], index: 4, kind: input, shape index: {}]
  %s5 = inlined_call_operand.vmem [shape: bf16[2,1024], index: 5, kind: input, shape index: {}]
  %s6 = inlined_call_operand.hbm [shape: bf16[128,2], index: 6, kind: input, shape index: {}]
  %s7 = inlined_call_operand.hbm [shape: f32[128,1], index: 7, kind: input, shape index: {}]
  %s8 = inlined_call_operand.vmem [shape: bf16[128,128], index: 8, kind: input, shape index: {}]
  %s9 = inlined_call_operand.hbm [shape: f32[128,1], index: 9, kind: input, shape index: {}]
  %s10 = inlined_call_operand.hbm [shape: f32[8,1024], index: 10, kind: output, shape index: {}]
  %s11 = sld [smem:[#allocation0]]
  $region89: #{forward.1} parent=0
    _
  %s13 = ssub.s32 1, %s11
  %s14 = scalar_select 0, %s13, %s11
  $region1: #{forward.1} parent=0
    #allocation2 [shape = 'u8[32768]{0}', space=vmem, size = 0x8000, scoped, tag = 'input window, operand 3, single buffered']
    #allocation3 [shape = 's32[2]{0}', space=sflag, size = 0x8, scoped, tag = 'scoped memory for forward.1']
    #allocation4 [shape = 's32[2]{0}', space=sflag, size = 0x8, scoped, tag = 'scoped memory for forward.1']
    #allocation5 [shape = 'u8[32768]{0}', space=vmem, size = 0x8000, scoped, tag = 'input window, operand 6, single buffered']
    #allocation6 [shape = 's32[1]{0}', space=sflag, size = 0x4, scoped, tag = 'scoped memory for forward.1']
    #allocation7 [shape = 'u8[65536]{0}', space=vmem, size = 0x10000, scoped, tag = 'input window, operand 7, single buffered']
    #allocation8 [shape = 'u8[65536]{0}', space=vmem, size = 0x10000, scoped, tag = 'input window, operand 9, single buffered']
    #allocation9 [shape = 's32[1]{0}', space=sflag, size = 0x4, scoped, tag = 'scoped memory for forward.1']
    #allocation10 [shape = 'u8[32768]{0}', space=vmem, size = 0x8000, scoped, tag = 'output window, operand 0']
    %15 = vsyncpa [#allocation3], 0
    %16 = vsyncpa [#allocation6], 0
    %17 = vsyncpa [#allocation9], 0
    %18 = vsyncpa [#allocation4], 0
    %s19 = scalar_lea.sflag [#allocation4], 1
    %20 = vsyncpa %s19, 0
    loop: start=0, step=1, limit=4
    $region2: #{forward.1} parent=1 // loop_pre_header
      _
    $region3: #{forward.1} parent=1 // loop_header
      %s22 = sphi 0, %s26
      %p23 = scmp.ge.s32.totalorder %s22, 4
      %s30 = sphi 0, %s30
      %s32 = sphi 0, %s30
      %s33 = sphi 0, %s32
      %s47 = sphi 0, %s33
      %s51 = sphi 0, %s51
      %s53 = sphi 0, %s51
      %s54 = sphi 0, %s53
      %s68 = sphi 0, %s54
      %s72 = sphi 0, %s72
      %s74 = sphi 0, %s72
      %s75 = sphi 0, %s74
      %s89 = sphi 0, %s75
      %s93 = sphi 0, %s93
      %s95 = sphi 0, %s93
      %s96 = sphi 0, %s95
      %s110 = sphi 0, %s96
      %s114 = sphi 0, %s114
      %s116 = sphi 0, %s114
      %s117 = sphi 0, %s116
      %s131 = sphi 0, %s117
      %s137 = sphi 0, %s139
      %s140 = sphi 0, %s137
      %s141 = sphi 0, %s140
      %s157 = sphi 0, %s141
      %s161 = sphi 0, %s161
      %s163 = sphi 0, %s161
      %s164 = sphi 0, %s163
      %s178 = sphi 0, %s164
      %s182 = sphi 0, %s182
      %s184 = sphi 0, %s182
      %s185 = sphi 0, %s184
      %s199 = sphi 0, %s185
      %s203 = sphi 0, %s203
      %s205 = sphi 0, %s203
      %s206 = sphi 0, %s205
      %s220 = sphi 0, %s206
      %s224 = sphi 0, %s224
      %s226 = sphi 0, %s224
      %s227 = sphi 0, %s226
      %s241 = sphi 0, %s227
      %s247 = sphi 0, %s249
      %s250 = sphi 0, %s247
      %s251 = sphi 0, %s250
      %s267 = sphi 0, %s251
    $region4: #{forward.1} parent=1 // loop_header_branch
      %25 = sbr.rel (%p23) target = $region8
    $region5: #{forward.1} parent=1 // loop_body
      %s27 = ssub.s32 %s22, 1
      %s28 = ssub.s32 %s22, 2
      %s29 = sadd.s32 %s22, 1
      %s31 = sadd.s32 %s30, 1
      %p34 = scmp.eq.s32.totalorder %s22, 1
      %p35 = scmp.ne.s32.totalorder %s30, %s32
      %p36 = scmp.eq.s32.totalorder %s22, 0
      %p37 = por %p35, %p36
      %p38 = scmp.ne.s32.totalorder %s30, %s32
      %p39 = scmp.eq.s32.totalorder %s27, 1
      %p40 = por %p38, %p39
      %p41 = scmp.ne.s32.totalorder %s32, %s33
      %p42 = scmp.eq.s32.totalorder %s27, 0
      %p43 = por %p41, %p42
      %p44 = scmp.ne.s32.totalorder %s32, %s33
      %p45 = scmp.eq.s32.totalorder %s28, 1
      %p46 = por %p44, %p45
      %p48 = scmp.ne.s32.totalorder %s33, %s47
      %p49 = scmp.eq.s32.totalorder %s28, 0
      %p50 = por %p48, %p49
      %s52 = sadd.s32 %s51, 1
      %p55 = scmp.eq.s32.totalorder %s22, 1
      %p56 = scmp.ne.s32.totalorder %s51, %s53
      %p57 = scmp.eq.s32.totalorder %s22, 0
      %p58 = por %p56, %p57
      %p59 = scmp.ne.s32.totalorder %s51, %s53
      %p60 = scmp.eq.s32.totalorder %s27, 1
      %p61 = por %p59, %p60
      %p62 = scmp.ne.s32.totalorder %s53, %s54
      %p63 = scmp.eq.s32.totalorder %s27, 0
      %p64 = por %p62, %p63
      %p65 = scmp.ne.s32.totalorder %s53, %s54
      %p66 = scmp.eq.s32.totalorder %s28, 1
      %p67 = por %p65, %p66
      %p69 = scmp.ne.s32.totalorder %s54, %s68
      %p70 = scmp.eq.s32.totalorder %s28, 0
      %p71 = por %p69, %p70
      %s73 = sadd.s32 %s72, 1
      %p76 = scmp.eq.s32.totalorder %s22, 1
      %p77 = scmp.ne.s32.totalorder %s72, %s74
      %p78 = scmp.eq.s32.totalorder %s22, 0
      %p79 = por %p77, %p78
      %p80 = scmp.ne.s32.totalorder %s72, %s74
      %p81 = scmp.eq.s32.totalorder %s27, 1
      %p82 = por %p80, %p81
      %p83 = scmp.ne.s32.totalorder %s74, %s75
      %p84 = scmp.eq.s32.totalorder %s27, 0
      %p85 = por %p83, %p84
      %p86 = scmp.ne.s32.totalorder %s74, %s75
      %p87 = scmp.eq.s32.totalorder %s28, 1
      %p88 = por %p86, %p87
      %p90 = scmp.ne.s32.totalorder %s75, %s89
      %p91 = scmp.eq.s32.totalorder %s28, 0
      %p92 = por %p90, %p91
      %s94 = sadd.s32 %s93, 1
      %p97 = scmp.eq.s32.totalorder %s22, 1
      %p98 = scmp.ne.s32.totalorder %s93, %s95
      %p99 = scmp.eq.s32.totalorder %s22, 0
      %p100 = por %p98, %p99
      %p101 = scmp.ne.s32.totalorder %s93, %s95
      %p102 = scmp.eq.s32.totalorder %s27, 1
      %p103 = por %p101, %p102
      %p104 = scmp.ne.s32.totalorder %s95, %s96
      %p105 = scmp.eq.s32.totalorder %s27, 0
      %p106 = por %p104, %p105
      %p107 = scmp.ne.s32.totalorder %s95, %s96
      %p108 = scmp.eq.s32.totalorder %s28, 1
      %p109 = por %p107, %p108
      %p111 = scmp.ne.s32.totalorder %s96, %s110
      %p112 = scmp.eq.s32.totalorder %s28, 0
      %p113 = por %p111, %p112
      %s115 = sadd.s32 %s114, 1
      %p118 = scmp.eq.s32.totalorder %s22, 1
      %p119 = scmp.ne.s32.totalorder %s114, %s116
      %p120 = scmp.eq.s32.totalorder %s22, 0
      %p121 = por %p119, %p120
      %p122 = scmp.ne.s32.totalorder %s114, %s116
      %p123 = scmp.eq.s32.totalorder %s27, 1
      %p124 = por %p122, %p123
      %p125 = scmp.ne.s32.totalorder %s116, %s117
      %p126 = scmp.eq.s32.totalorder %s27, 0
      %p127 = por %p125, %p126
      %p128 = scmp.ne.s32.totalorder %s116, %s117
      %p129 = scmp.eq.s32.totalorder %s28, 1
      %p130 = por %p128, %p129
      %p132 = scmp.ne.s32.totalorder %s117, %s131
      %p133 = scmp.eq.s32.totalorder %s28, 0
      %p134 = por %p132, %p133
      %s135 = ssub.s32 %s22, %s29
      %p136 = scmp.eq.s32.totalorder %s135, 0
      %s138 = sadd.s32 %s137, 1
      %s139 = scalar_select %p136, %s137, %s138
      %p142 = pneg %p136
      %p143 = scmp.eq.s32.totalorder %s22, 1
      %p144 = por %p142, %p143
      %p145 = scmp.ne.s32.totalorder %s137, %s140
      %p146 = scmp.eq.s32.totalorder %s22, 0
      %p147 = por %p145, %p146
      %p148 = scmp.ne.s32.totalorder %s137, %s140
      %p149 = scmp.eq.s32.totalorder %s27, 1
      %p150 = por %p148, %p149
      %p151 = scmp.ne.s32.totalorder %s140, %s141
      %p152 = scmp.eq.s32.totalorder %s27, 0
      %p153 = por %p151, %p152
      %p154 = scmp.ne.s32.totalorder %s140, %s141
      %p155 = scmp.eq.s32.totalorder %s28, 1
      %p156 = por %p154, %p155
      %p158 = scmp.ne.s32.totalorder %s141, %s157
      %p159 = scmp.eq.s32.totalorder %s28, 0
      %p160 = por %p158, %p159
      %s162 = sadd.s32 %s161, 1
      %p165 = scmp.eq.s32.totalorder %s22, 1
      %p166 = scmp.ne.s32.totalorder %s161, %s163
      %p167 = scmp.eq.s32.totalorder %s22, 0
      %p168 = por %p166, %p167
      %p169 = scmp.ne.s32.totalorder %s161, %s163
      %p170 = scmp.eq.s32.totalorder %s27, 1
      %p171 = por %p169, %p170
      %p172 = scmp.ne.s32.totalorder %s163, %s164
      %p173 = scmp.eq.s32.totalorder %s27, 0
      %p174 = por %p172, %p173
      %p175 = scmp.ne.s32.totalorder %s163, %s164
      %p176 = scmp.eq.s32.totalorder %s28, 1
      %p177 = por %p175, %p176
      %p179 = scmp.ne.s32.totalorder %s164, %s178
      %p180 = scmp.eq.s32.totalorder %s28, 0
      %p181 = por %p179, %p180
      %s183 = sadd.s32 %s182, 1
      %p186 = scmp.eq.s32.totalorder %s22, 1
      %p187 = scmp.ne.s32.totalorder %s182, %s184
      %p188 = scmp.eq.s32.totalorder %s22, 0
      %p189 = por %p187, %p188
      %p190 = scmp.ne.s32.totalorder %s182, %s184
      %p191 = scmp.eq.s32.totalorder %s27, 1
      %p192 = por %p190, %p191
      %p193 = scmp.ne.s32.totalorder %s184, %s185
      %p194 = scmp.eq.s32.totalorder %s27, 0
      %p195 = por %p193, %p194
      %p196 = scmp.ne.s32.totalorder %s184, %s185
      %p197 = scmp.eq.s32.totalorder %s28, 1
      %p198 = por %p196, %p197
      %p200 = scmp.ne.s32.totalorder %s185, %s199
      %p201 = scmp.eq.s32.totalorder %s28, 0
      %p202 = por %p200, %p201
      %s204 = sadd.s32 %s203, 1
      %p207 = scmp.eq.s32.totalorder %s22, 1
      %p208 = scmp.ne.s32.totalorder %s203, %s205
      %p209 = scmp.eq.s32.totalorder %s22, 0
      %p210 = por %p208, %p209
      %p211 = scmp.ne.s32.totalorder %s203, %s205
      %p212 = scmp.eq.s32.totalorder %s27, 1
      %p213 = por %p211, %p212
      %p214 = scmp.ne.s32.totalorder %s205, %s206
      %p215 = scmp.eq.s32.totalorder %s27, 0
      %p216 = por %p214, %p215
      %p217 = scmp.ne.s32.totalorder %s205, %s206
      %p218 = scmp.eq.s32.totalorder %s28, 1
      %p219 = por %p217, %p218
      %p221 = scmp.ne.s32.totalorder %s206, %s220
      %p222 = scmp.eq.s32.totalorder %s28, 0
      %p223 = por %p221, %p222
      %s225 = sadd.s32 %s224, 1
      %p228 = scmp.eq.s32.totalorder %s22, 1
      %p229 = scmp.ne.s32.totalorder %s224, %s226
      %p230 = scmp.eq.s32.totalorder %s22, 0
      %p231 = por %p229, %p230
      %p232 = scmp.ne.s32.totalorder %s224, %s226
      %p233 = scmp.eq.s32.totalorder %s27, 1
      %p234 = por %p232, %p233
      %p235 = scmp.ne.s32.totalorder %s226, %s227
      %p236 = scmp.eq.s32.totalorder %s27, 0
      %p237 = por %p235, %p236
      %p238 = scmp.ne.s32.totalorder %s226, %s227
      %p239 = scmp.eq.s32.totalorder %s28, 1
      %p240 = por %p238, %p239
      %p242 = scmp.ne.s32.totalorder %s227, %s241
      %p243 = scmp.eq.s32.totalorder %s28, 0
      %p244 = por %p242, %p243
      %s245 = ssub.s32 %s22, %s29
      %p246 = scmp.eq.s32.totalorder %s245, 0
      %s248 = sadd.s32 %s247, 1
      %s249 = scalar_select %p246, %s247, %s248
      %p252 = pneg %p246
      %p253 = scmp.eq.s32.totalorder %s22, 1
      %p254 = por %p252, %p253
      %p255 = scmp.ne.s32.totalorder %s247, %s250
      %p256 = scmp.eq.s32.totalorder %s22, 0
      %p257 = por %p255, %p256
      %p258 = scmp.ne.s32.totalorder %s247, %s250
      %p259 = scmp.eq.s32.totalorder %s27, 1
      %p260 = por %p258, %p259
      %p261 = scmp.ne.s32.totalorder %s250, %s251
      %p262 = scmp.eq.s32.totalorder %s27, 0
      %p263 = por %p261, %p262
      %p264 = scmp.ne.s32.totalorder %s250, %s251
      %p265 = scmp.eq.s32.totalorder %s28, 1
      %p266 = por %p264, %p265
      %p268 = scmp.ne.s32.totalorder %s251, %s267
      %p269 = scmp.eq.s32.totalorder %s28, 0
      %p270 = por %p268, %p269
      %p271 = scmp.le.s32.totalorder 1, %s22
      %p272 = scmp.lt.s32.totalorder %s22, 3
      %p273 = pnand %p271, %p272
      %p274 = pneg %p273
      // Predicated region
      $region9: #{forward.1} parent=5 // pred_check
        _
      $region10: #{forward.1} parent=5 // pred_check_branch
        %276 = sbr.rel (%p273) target = $region12
      $region11: #{forward.1} parent=5 // pred_region
        %s277 = ssub.s32 %s22, 1
        // Predicated region
        $region13: #{forward.1} parent=11 // pred_check
          %p278 = pneg %p43
        $region14: #{forward.1} parent=11 // pred_check_branch
          %280 = sbr.rel (%p278) target = $region16
        $region15: #{forward.1} parent=11 // pred_region
          _
        $region16: #{forward.1} parent=11 // pred_fallthru
          _
        // Predicated region
        $region17: #{forward.1} parent=11 // pred_check
          %p281 = pneg %p64
        $region18: #{forward.1} parent=11 // pred_check_branch
          %283 = sbr.rel (%p281) target = $region20
        $region19: #{forward.1} parent=11 // pred_region
          _
        $region20: #{forward.1} parent=11 // pred_fallthru
          _
        // Predicated region
        $region21: #{forward.1} parent=11 // pred_check
          %p284 = pneg %p85
        $region22: #{forward.1} parent=11 // pred_check_branch
          %286 = sbr.rel (%p284) target = $region24
        $region23: #{forward.1} parent=11 // pred_region
          _
        $region24: #{forward.1} parent=11 // pred_fallthru
          _
        // Predicated region
        $region25: #{forward.1} parent=11 // pred_check
          %p287 = pneg %p106
        $region26: #{forward.1} parent=11 // pred_check_branch
          %289 = sbr.rel (%p287) target = $region28
        $region27: #{forward.1} parent=11 // pred_region
          %s291 = ssub.s32 1024, 1024
          %292 = vsyncadd [#allocation3], %s291
          %s293 = sshll.u32 [#allocation2], 4
          %s294 = int_to_ptr.vmem [resolvable:$true] %s293
          %299 = dma.hbm_to_vmem [thread:$0]  %s3, 1024, %s294, [#allocation3], 64, 64, 4
        $region28: #{forward.1} parent=11 // pred_fallthru
          _
        // Predicated region
        $region29: #{forward.1} parent=11 // pred_check
          %p300 = pneg %p127
        $region30: #{forward.1} parent=11 // pred_check_branch
          %302 = sbr.rel (%p300) target = $region32
        $region31: #{forward.1} parent=11 // pred_region
          _
        $region32: #{forward.1} parent=11 // pred_fallthru
          _
        // Predicated region
        $region33: #{forward.1} parent=11 // pred_check
          %p303 = pneg %p174
        $region34: #{forward.1} parent=11 // pred_check_branch
          %305 = sbr.rel (%p303) target = $region36
        $region35: #{forward.1} parent=11 // pred_region
          %s307 = ssub.s32 1024, 1024
          %308 = vsyncadd [#allocation6], %s307
          %s309 = sshll.u32 [#allocation5], 4
          %s310 = int_to_ptr.vmem [resolvable:$true] %s309
          %315 = dma.hbm_to_vmem [thread:$0]  %s6, 1024, %s310, [#allocation6], 64, 64, 4
        $region36: #{forward.1} parent=11 // pred_fallthru
          _
        // Predicated region
        $region37: #{forward.1} parent=11 // pred_check
          %p316 = pneg %p195
        $region38: #{forward.1} parent=11 // pred_check_branch
          %318 = sbr.rel (%p316) target = $region40
        $region39: #{forward.1} parent=11 // pred_region
          %s320 = ssub.s32 2048, 2048
          %321 = vsyncadd [#allocation6], %s320
          %s322 = sshll.u32 [#allocation7], 4
          %s323 = int_to_ptr.vmem [resolvable:$true] %s322
          %328 = dma.hbm_to_vmem [thread:$0]  %s7, 2048, %s323, [#allocation6], 128, 128, 8
        $region40: #{forward.1} parent=11 // pred_fallthru
          _
        // Predicated region
        $region41: #{forward.1} parent=11 // pred_check
          %p329 = pneg %p216
        $region42: #{forward.1} parent=11 // pred_check_branch
          %331 = sbr.rel (%p329) target = $region44
        $region43: #{forward.1} parent=11 // pred_region
          _
        $region44: #{forward.1} parent=11 // pred_fallthru
          _
        // Predicated region
        $region45: #{forward.1} parent=11 // pred_check
          %p332 = pneg %p237
        $region46: #{forward.1} parent=11 // pred_check_branch
          %334 = sbr.rel (%p332) target = $region48
        $region47: #{forward.1} parent=11 // pred_region
          %s336 = ssub.s32 2048, 2048
          %337 = vsyncadd [#allocation9], %s336
          %s338 = sshll.u32 [#allocation8], 4
          %s339 = int_to_ptr.vmem [resolvable:$true] %s338
          %344 = dma.hbm_to_vmem [thread:$0]  %s9, 2048, %s339, [#allocation9], 128, 128, 8
        $region48: #{forward.1} parent=11 // pred_fallthru
          _
      $region12: #{forward.1} parent=5 // pred_fallthru
        _
      %p345 = scmp.lt.s32.totalorder %s22, 2
      // Predicated region
      $region49: #{forward.1} parent=5 // pred_check
        %p346 = pneg %p345
      $region50: #{forward.1} parent=5 // pred_check_branch
        %348 = sbr.rel (%p346) target = $region52
      $region51: #{forward.1} parent=5 // pred_region
        // Predicated region
        $region53: #{forward.1} parent=51 // pred_check
          %p349 = pneg %p147
        $region54: #{forward.1} parent=51 // pred_check_branch
          %351 = sbr.rel (%p349) target = $region56
        $region55: #{forward.1} parent=51 // pred_region
          %s352 = smul.u32 4, %s22
          %p353 = scmp.lt.s32.totalorder %s352, 7
          %s354 = scalar_select %p353, %s352, 7
          %s355 = scalar_lea.vmem %s5, %s354
          %s356 = smul.u32 4, %s22
        $region56: #{forward.1} parent=51 // pred_fallthru
          _
      $region52: #{forward.1} parent=5 // pred_fallthru
        _
      %p357 = scmp.le.s32.totalorder 1, %s22
      %p358 = scmp.lt.s32.totalorder %s22, 3
      %p359 = pnand %p357, %p358
      %p360 = pneg %p359
      // Predicated region
      $region57: #{forward.1} parent=5 // pred_check
        _
      $region58: #{forward.1} parent=5 // pred_check_branch
        %362 = sbr.rel (%p359) target = $region60
      $region59: #{forward.1} parent=5 // pred_region
        %s363 = ssub.s32 %s22, 1
        // Predicated region
        $region61: #{forward.1} parent=59 // pred_check
          %p364 = pneg %p106
        $region62: #{forward.1} parent=59 // pred_check_branch
          %366 = sbr.rel (%p364) target = $region64
        $region63: #{forward.1} parent=59 // pred_region
          %367 = dma.done [#allocation3], 1024
        $region64: #{forward.1} parent=59 // pred_fallthru
          _
        // Predicated region
        $region65: #{forward.1} parent=59 // pred_check
          %p368 = pneg %p174
        $region66: #{forward.1} parent=59 // pred_check_branch
          %370 = sbr.rel (%p368) target = $region68
        $region67: #{forward.1} parent=59 // pred_region
          %371 = dma.done [#allocation6], 1024
        $region68: #{forward.1} parent=59 // pred_fallthru
          _
        // Predicated region
        $region69: #{forward.1} parent=59 // pred_check
          %p372 = pneg %p195
        $region70: #{forward.1} parent=59 // pred_check_branch
          %374 = sbr.rel (%p372) target = $region72
        $region71: #{forward.1} parent=59 // pred_region
          %375 = dma.done [#allocation6], 2048
        $region72: #{forward.1} parent=59 // pred_fallthru
          _
        // Predicated region
        $region73: #{forward.1} parent=59 // pred_check
          %p376 = pneg %p237
        $region74: #{forward.1} parent=59 // pred_check_branch
          %378 = sbr.rel (%p376) target = $region76
        $region75: #{forward.1} parent=59 // pred_region
          %379 = dma.done [#allocation9], 2048
        $region76: #{forward.1} parent=59 // pred_fallthru
          _
        %p380 = pneg %p43
        %p381 = pneg %p40
        %p382 = pneg %p64
        %p383 = pneg %p61
        %p384 = pneg %p85
        %p385 = pneg %p82
        %p386 = pneg %p106
        %p387 = pneg %p103
        %p388 = pneg %p127
        %p389 = pneg %p124
        %s390 = smul.u32 4, %s27
        %p391 = scmp.lt.s32.totalorder %s390, 7
        %s392 = scalar_select %p391, %s390, 7
        %s393 = scalar_lea.vmem %s5, %s392
        %p394 = pneg %p153
        %p395 = pneg %p150
        %p396 = pneg %p174
        %p397 = pneg %p171
        %p398 = pneg %p195
        %p399 = pneg %p192
        %p400 = pneg %p216
        %p401 = pneg %p213
        %p402 = pneg %p237
        %p403 = pneg %p234
        %p404 = pneg %p263
        %p405 = pneg %p260
        %s406 = sand.u32 %s250, 1
        %s407 = scalar_lea.sflag [#allocation4], %s406
        %s408 = sand.u32 %s250, 1
        %s409 = smul.addr %s408, 32
        %s410 = scalar_lea.vmem [#allocation10], %s409
        %s411 = smul.u32 4, %s27
        %p412 = scmp.lt.s32.totalorder %s411, 7
        %s413 = scalar_select %p412, %s411, 7
        %s414 = scalar_lea.vmem %s5, %s413
        %s415 = smul.u32 4, %s27
        %s416 = smul.u32 4, %s27
        %v418 = vld [vmem:[%s0] sm:$0xf]
        %v419 = vld [vmem:[%s1] sm:$0xf]
        %v420 = vld [vmem:[%s1 + $0x4] sm:$0xf]
        %v421 = vld [vmem:[%s2] sm:$0x1]
        %v423 = vlaneseq
        %v424 = vshrl.u32 %v423, 7
        %v425 = vsub.s32 0, %v424
        %v426 = vrot.slane %v421, %v425
        %v430 = vunpack.c.l.b16 %v419
        %v431 = vunpack.c.l.b16 %v420
        %v432 = vpack.c.b16 %v431, %v430
        %vm434 = vcmask 130048
        %v436 = vsel %vm434, %v418, 0
        %438 = vmatprep.subr.bf16.mxu0 0
        %439 = vmatpush1.bf16.msra.mxu0 %v432
        %440 = vmatprep.subr.bf16.mxu0 0
        %441 = vmatpush1.bf16.msra.mxu0 0
        %442 = vmatprep.subr.bf16.mxu0 0
        %443 = vmatpush1.bf16.msra.mxu0 0
        %444 = vmatprep.subr.bf16.mxu0 0
        %445 = vmatpush1.bf16.msra.mxu0 0
        %446 = vmatprep.subr.bf16.mxu0 0
        %447 = vmatpush1.bf16.msra.mxu0 0
        %448 = vmatprep.subr.bf16.mxu0 0
        %449 = vmatpush1.bf16.msra.mxu0 0
        %450 = vmatprep.subr.bf16.mxu0 0
        %451 = vmatpush1.bf16.msra.mxu0 0
        %452 = vmatprep.subr.bf16.mxu0 0
        %453 = vmatpush1.bf16.msra.mxu0 0
        %454 = vmatprep.subr.bf16.mxu0 0
        %455 = vmatpush1.bf16.msra.mxu0 0
        %456 = vmatprep.subr.bf16.mxu0 0
        %457 = vmatpush1.bf16.msra.mxu0 0
        %458 = vmatprep.subr.bf16.mxu0 0
        %459 = vmatpush1.bf16.msra.mxu0 0
        %460 = vmatprep.subr.bf16.mxu0 0
        %461 = vmatpush1.bf16.msra.mxu0 0
        %462 = vmatprep.subr.bf16.mxu0 0
        %463 = vmatpush1.bf16.msra.mxu0 0
        %464 = vmatprep.subr.bf16.mxu0 0
        %465 = vmatpush1.bf16.msra.mxu0 0
        %466 = vmatprep.subr.bf16.mxu0 0
        %467 = vmatpush1.bf16.msra.mxu0 0
        %468 = vmatprep.subr.bf16.mxu0 0
        %469 = vmatpush1.bf16.msra.mxu0 0
        %470 = vmatprep.mubr.bf16.mxu0 0
        %471 = vmatmul.mubr.bf16.gmra.mrb[0].mxu0 %v436
        %v472 = vpop.f32.mrb[0].mxu0
        %v473 = vadd.f32 %v426, %v472
        %v474 = vpop.f32.mrb[0].mxu0
        %v475 = vpop.f32.mrb[0].mxu0
        %v476 = vpop.f32.mrb[0].mxu0
        %477 = vdwg.mxu0
        %v478 = vmax.f32 %v473, 0.0
        %v479 = vld [vmem:[#allocation2] sm:$0xf]
        %v480 = vld [vmem:[#allocation2 + $0x4] sm:$0xf]
        %v481 = vld [vmem:[#allocation2 + $0x8] sm:$0xf]
        %v482 = vld [vmem:[#allocation2 + $0xc] sm:$0xf]
        %v483 = vld [vmem:[#allocation2 + $0x10] sm:$0xf]
        %v484 = vld [vmem:[#allocation2 + $0x14] sm:$0xf]
        %v485 = vld [vmem:[#allocation2 + $0x18] sm:$0xf]
        %v486 = vld [vmem:[#allocation2 + $0x1c] sm:$0xf]
        %v487 = vld [vmem:[#allocation2 + $0x20] sm:$0xf]
        %v488 = vld [vmem:[#allocation2 + $0x24] sm:$0xf]
        %v489 = vld [vmem:[#allocation2 + $0x28] sm:$0xf]
        %v490 = vld [vmem:[#allocation2 + $0x2c] sm:$0xf]
        %v491 = vld [vmem:[#allocation2 + $0x30] sm:$0xf]
        %v492 = vld [vmem:[#allocation2 + $0x34] sm:$0xf]
        %v493 = vld [vmem:[#allocation2 + $0x38] sm:$0xf]
        %v494 = vld [vmem:[#allocation2 + $0x3c] sm:$0xf]
        %v495 = vld [vmem:[%s4] sm:$0x1]
        %v496 = vpack.c.bf16 %v478, %v478
        %v498 = vlaneseq
        %v499 = vshrl.u32 %v498, 7
        %v500 = vsub.s32 0, %v499
        %v501 = vrot.slane %v495, %v500
        %v519 = vunpack.c.l.b16 %v479
        %v520 = vunpack.c.l.b16 %v480
        %v521 = vunpack.c.l.b16 %v481
        %v522 = vunpack.c.l.b16 %v482
        %v523 = vunpack.c.l.b16 %v483
        %v524 = vunpack.c.l.b16 %v484
        %v525 = vunpack.c.l.b16 %v485
        %v526 = vunpack.c.l.b16 %v486
        %v527 = vunpack.c.l.b16 %v487
        %v528 = vunpack.c.l.b16 %v488
        %v529 = vunpack.c.l.b16 %v489
        %v530 = vunpack.c.l.b16 %v490
        %v531 = vunpack.c.l.b16 %v491
        %v532 = vunpack.c.l.b16 %v492
        %v533 = vunpack.c.l.b16 %v493
        %v534 = vunpack.c.l.b16 %v494
        %v535 = vpack.c.b16 %v520, %v519
        %v536 = vpack.c.b16 %v522, %v521
        %v537 = vpack.c.b16 %v524, %v523
        %v538 = vpack.c.b16 %v526, %v525
        %v539 = vpack.c.b16 %v528, %v527
        %v540 = vpack.c.b16 %v530, %v529
        %v541 = vpack.c.b16 %v532, %v531
        %v542 = vpack.c.b16 %v534, %v533
        %551 = vmatprep.subr.bf16.mxu0 0
        %552 = vmatpush1.bf16.msra.mxu0 %v535
        %553 = vmatprep.subr.bf16.mxu0 0
        %554 = vmatpush1.bf16.msra.mxu0 %v536
        %555 = vmatprep.subr.bf16.mxu0 0
        %556 = vmatpush1.bf16.msra.mxu0 %v537
        %557 = vmatprep.subr.bf16.mxu0 0
        %558 = vmatpush1.bf16.msra.mxu0 %v538
        %559 = vmatprep.subr.bf16.mxu0 0
        %560 = vmatpush1.bf16.msra.mxu0 %v539
        %561 = vmatprep.subr.bf16.mxu0 0
        %562 = vmatpush1.bf16.msra.mxu0 %v540
        %563 = vmatprep.subr.bf16.mxu0 0
        %564 = vmatpush1.bf16.msra.mxu0 %v541
        %565 = vmatprep.subr.bf16.mxu0 0
        %566 = vmatpush1.bf16.msra.mxu0 %v542
        %567 = vmatprep.subr.bf16.mxu0 0
        %568 = vmatpush1.bf16.msra.mxu0 0
        %569 = vmatprep.subr.bf16.mxu0 0
        %570 = vmatpush1.bf16.msra.mxu0 0
        %571 = vmatprep.subr.bf16.mxu0 0
        %572 = vmatpush1.bf16.msra.mxu0 0
        %573 = vmatprep.subr.bf16.mxu0 0
        %574 = vmatpush1.bf16.msra.mxu0 0
        %575 = vmatprep.subr.bf16.mxu0 0
        %576 = vmatpush1.bf16.msra.mxu0 0
        %577 = vmatprep.subr.bf16.mxu0 0
        %578 = vmatpush1.bf16.msra.mxu0 0
        %579 = vmatprep.subr.bf16.mxu0 0
        %580 = vmatpush1.bf16.msra.mxu0 0
        %581 = vmatprep.subr.bf16.mxu0 0
        %582 = vmatpush1.bf16.msra.mxu0 0
        %583 = vmatprep.mubr.bf16.mxu0 0
        %584 = vmatmul.mubr.bf16.gmra.mrb[0].mxu0 %v496
        %v585 = vpop.f32.mrb[0].mxu0
        %v586 = vadd.f32 %v501, %v585
        %v587 = vpop.f32.mrb[0].mxu0
        %v588 = vpop.f32.mrb[0].mxu0
        %v589 = vpop.f32.mrb[0].mxu0
        %590 = vdwg.mxu0
        %v591 = vtanh.pop %v586
        %v592 = vld [vmem:[%s414] sm:$0xf]
        %v593 = vld [vmem:[#allocation5] sm:$0xf]
        %v594 = vld [vmem:[#allocation5 + $0x4] sm:$0xf]
        %v595 = vld [vmem:[#allocation5 + $0x8] sm:$0xf]
        %v596 = vld [vmem:[#allocation5 + $0xc] sm:$0xf]
        %v597 = vld [vmem:[#allocation5 + $0x10] sm:$0xf]
        %v598 = vld [vmem:[#allocation5 + $0x14] sm:$0xf]
        %v599 = vld [vmem:[#allocation5 + $0x18] sm:$0xf]
        %v600 = vld [vmem:[#allocation5 + $0x1c] sm:$0xf]
        %v601 = vld [vmem:[#allocation5 + $0x20] sm:$0xf]
        %v602 = vld [vmem:[#allocation5 + $0x24] sm:$0xf]
        %v603 = vld [vmem:[#allocation5 + $0x28] sm:$0xf]
        %v604 = vld [vmem:[#allocation5 + $0x2c] sm:$0xf]
        %v605 = vld [vmem:[#allocation5 + $0x30] sm:$0xf]
        %v606 = vld [vmem:[#allocation5 + $0x34] sm:$0xf]
        %v607 = vld [vmem:[#allocation5 + $0x38] sm:$0xf]
        %v608 = vld [vmem:[#allocation5 + $0x3c] sm:$0xf]
        %v609 = vld [vmem:[#allocation7] sm:$0xff]
        %v610 = vld [vmem:[#allocation7 + $0x8] sm:$0xff]
        %v611 = vld [vmem:[#allocation7 + $0x10] sm:$0xff]
        %v612 = vld [vmem:[#allocation7 + $0x18] sm:$0xff]
        %v613 = vld [vmem:[#allocation7 + $0x20] sm:$0xff]
        %v614 = vld [vmem:[#allocation7 + $0x28] sm:$0xff]
        %v615 = vld [vmem:[#allocation7 + $0x30] sm:$0xff]
        %v616 = vld [vmem:[#allocation7 + $0x38] sm:$0xff]
        %v617 = vld [vmem:[#allocation7 + $0x40] sm:$0xff]
        %v618 = vld [vmem:[#allocation7 + $0x48] sm:$0xff]
        %v619 = vld [vmem:[#allocation7 + $0x50] sm:$0xff]
        %v620 = vld [vmem:[#allocation7 + $0x58] sm:$0xff]
        %v621 = vld [vmem:[#allocation7 + $0x60] sm:$0xff]
        %v622 = vld [vmem:[#allocation7 + $0x68] sm:$0xff]
        %v623 = vld [vmem:[#allocation7 + $0x70] sm:$0xff]
        %v624 = vld [vmem:[#allocation7 + $0x78] sm:$0xff]
        %626 = vset.pattern.permute.xlu0 0
        %627 = vperm.xlu0 %626, %v609
        %v628 = vpop.permute.xlu0 %627
        %631 = vset.pattern.permute.xlu0 0
        %632 = vperm.xlu0 %631, %v610
        %v633 = vpop.permute.xlu0 %632
        %636 = vset.pattern.permute.xlu0 0
        %637 = vperm.xlu0 %636, %v611
        %v638 = vpop.permute.xlu0 %637
        %641 = vset.pattern.permute.xlu0 0
        %642 = vperm.xlu0 %641, %v612
        %v643 = vpop.permute.xlu0 %642
        %646 = vset.pattern.permute.xlu0 0
        %647 = vperm.xlu0 %646, %v613
        %v648 = vpop.permute.xlu0 %647
        %651 = vset.pattern.permute.xlu0 0
        %652 = vperm.xlu0 %651, %v614
        %v653 = vpop.permute.xlu0 %652
        %656 = vset.pattern.permute.xlu0 0
        %657 = vperm.xlu0 %656, %v615
        %v658 = vpop.permute.xlu0 %657
        %661 = vset.pattern.permute.xlu0 0
        %662 = vperm.xlu0 %661, %v616
        %v663 = vpop.permute.xlu0 %662
        %666 = vset.pattern.permute.xlu0 0
        %667 = vperm.xlu0 %666, %v617
        %v668 = vpop.permute.xlu0 %667
        %671 = vset.pattern.permute.xlu0 0
        %672 = vperm.xlu0 %671, %v618
        %v673 = vpop.permute.xlu0 %672
        %676 = vset.pattern.permute.xlu0 0
        %677 = vperm.xlu0 %676, %v619
        %v678 = vpop.permute.xlu0 %677
        %681 = vset.pattern.permute.xlu0 0
        %682 = vperm.xlu0 %681, %v620
        %v683 = vpop.permute.xlu0 %682
        %686 = vset.pattern.permute.xlu0 0
        %687 = vperm.xlu0 %686, %v621
        %v688 = vpop.permute.xlu0 %687
        %691 = vset.pattern.permute.xlu0 0
        %692 = vperm.xlu0 %691, %v622
        %v693 = vpop.permute.xlu0 %692
        %696 = vset.pattern.permute.xlu0 0
        %697 = vperm.xlu0 %696, %v623
        %v698 = vpop.permute.xlu0 %697
        %701 = vset.pattern.permute.xlu0 0
        %702 = vperm.xlu0 %701, %v624
        %v703 = vpop.permute.xlu0 %702
        %v721 = vunpack.c.l.b16 %v593
        %v722 = vunpack.c.l.b16 %v594
        %v723 = vunpack.c.l.b16 %v595
        %v724 = vunpack.c.l.b16 %v596
        %v725 = vunpack.c.l.b16 %v597
        %v726 = vunpack.c.l.b16 %v598
        %v727 = vunpack.c.l.b16 %v599
        %v728 = vunpack.c.l.b16 %v600
        %v729 = vunpack.c.l.b16 %v601
        %v730 = vunpack.c.l.b16 %v602
        %v731 = vunpack.c.l.b16 %v603
        %v732 = vunpack.c.l.b16 %v604
        %v733 = vunpack.c.l.b16 %v605
        %v734 = vunpack.c.l.b16 %v606
        %v735 = vunpack.c.l.b16 %v607
        %v736 = vunpack.c.l.b16 %v608
        %v737 = vpack.c.b16 %v722, %v721
        %v738 = vpack.c.b16 %v724, %v723
        %v739 = vpack.c.b16 %v726, %v725
        %v740 = vpack.c.b16 %v728, %v727
        %v741 = vpack.c.b16 %v730, %v729
        %v742 = vpack.c.b16 %v732, %v731
        %v743 = vpack.c.b16 %v734, %v733
        %v744 = vpack.c.b16 %v736, %v735
        %v747 = vunpack.c.l.s4 1966171168
        %v748 = vunpack.c.0.s8 %v747
        %v749 = vlaneseq
        %v750 = vshrl.u32 %v749, 7
        %v751 = vsub.s32 %v748, %v750
        %v752 = vrot.slane %v592, %v751
        %v753 = vcombine.high %v752, %v752
        %v755 = vunpack.c.l.s4 1966171168
        %v756 = vunpack.c.0.s8 %v755
        %v757 = vlaneseq
        %v758 = vshrl.u32 %v757, 7
        %v759 = vsub.s32 %v756, %v758
        %v760 = vrot.slane %v752, %v759
        %v762 = vunpack.c.l.s4 1966171168
        %v763 = vunpack.c.0.s8 %v762
        %v764 = vlaneseq
        %v765 = vshrl.u32 %v764, 7
        %v766 = vsub.s32 %v763, %v765
        %v767 = vrot.slane %v753, %v766
        %v768 = vcombine.high %v760, %v760
        %v769 = vcombine.high %v767, %v767
        %vm770 = vcmask 15360
        %v772 = vsel %vm770, %v737, 0
        %v775 = vsel %vm770, %v738, 0
        %v778 = vsel %vm770, %v739, 0
        %v781 = vsel %vm770, %v740, 0
        %v784 = vsel %vm770, %v741, 0
        %v787 = vsel %vm770, %v742, 0
        %v790 = vsel %vm770, %v743, 0
        %v793 = vsel %vm770, %v744, 0
        %vm795 = vcmask 1040384
        %v797 = vsel %vm795, %v760, 0
        %v800 = vsel %vm795, %v767, 0
        %v803 = vsel %vm795, %v768, 0
        %v806 = vsel %vm795, %v769, 0
        %808 = vmatprep.subr.bf16.mxu0 %v800
        %809 = vmatpush1.bf16.msra.mxu0 %v797
        %810 = vmatprep.subr.bf16.mxu0 0
        %811 = vmatpush1.bf16.msra.mxu0 0
        %812 = vmatprep.subr.bf16.mxu0 0
        %813 = vmatpush1.bf16.msra.mxu0 0
        %814 = vmatprep.subr.bf16.mxu0 0
        %815 = vmatpush1.bf16.msra.mxu0 0
        %816 = vmatprep.subr.bf16.mxu0 0
        %817 = vmatpush1.bf16.msra.mxu0 0
        %818 = vmatprep.subr.bf16.mxu0 0
        %819 = vmatpush1.bf16.msra.mxu0 0
        %820 = vmatprep.subr.bf16.mxu0 0
        %821 = vmatpush1.bf16.msra.mxu0 0
        %822 = vmatprep.subr.bf16.mxu0 0
        %823 = vmatpush1.bf16.msra.mxu0 0
        %824 = vmatprep.subr.bf16.mxu0 0
        %825 = vmatpush1.bf16.msra.mxu0 0
        %826 = vmatprep.subr.bf16.mxu0 0
        %827 = vmatpush1.bf16.msra.mxu0 0
        %828 = vmatprep.subr.bf16.mxu0 0
        %829 = vmatpush1.bf16.msra.mxu0 0
        %830 = vmatprep.subr.bf16.mxu0 0
        %831 = vmatpush1.bf16.msra.mxu0 0
        %832 = vmatprep.subr.bf16.mxu0 0
        %833 = vmatpush1.bf16.msra.mxu0 0
        %834 = vmatprep.subr.bf16.mxu0 0
        %835 = vmatpush1.bf16.msra.mxu0 0
        %836 = vmatprep.subr.bf16.mxu0 0
        %837 = vmatpush1.bf16.msra.mxu0 0
        %838 = vmatprep.subr.bf16.mxu0 0
        %839 = vmatpush1.bf16.msra.mxu0 0
        %840 = vmatprep.mubr.bf16.mxu0 0
        %841 = vmatmul.mubr.bf16.gmra.mrb[0].mxu0 %v772
        %v842 = vpop.f32.mrb[0].mxu0
        %v843 = vadd.f32 %v628, %v842
        %v844 = vpop.f32.mrb[0].mxu0
        %v845 = vadd.f32 %v628, %v844
        %v846 = vpop.f32.mrb[0].mxu0
        %v847 = vadd.f32 %v633, %v846
        %v848 = vpop.f32.mrb[0].mxu0
        %v849 = vadd.f32 %v633, %v848
        %850 = vmatprep.mubr.bf16.mxu0 0
        %851 = vmatmul.mubr.bf16.gmra.mrb[0].mxu0 %v775
        %v852 = vpop.f32.mrb[0].mxu0
        %v853 = vadd.f32 %v638, %v852
        %v854 = vpop.f32.mrb[0].mxu0
        %v855 = vadd.f32 %v638, %v854
        %v856 = vpop.f32.mrb[0].mxu0
        %v857 = vadd.f32 %v643, %v856
        %v858 = vpop.f32.mrb[0].mxu0
        %v859 = vadd.f32 %v643, %v858
        %860 = vmatprep.mubr.bf16.mxu0 0
        %861 = vmatmul.mubr.bf16.gmra.mrb[0].mxu0 %v778
        %v862 = vpop.f32.mrb[0].mxu0
        %v863 = vadd.f32 %v648, %v862
        %v864 = vpop.f32.mrb[0].mxu0
        %v865 = vadd.f32 %v648, %v864
        %v866 = vpop.f32.mrb[0].mxu0
        %v867 = vadd.f32 %v653, %v866
        %v868 = vpop.f32.mrb[0].mxu0
        %v869 = vadd.f32 %v653, %v868
        %870 = vmatprep.mubr.bf16.mxu0 0
        %871 = vmatmul.mubr.bf16.gmra.mrb[0].mxu0 %v781
        %v872 = vpop.f32.mrb[0].mxu0
        %v873 = vadd.f32 %v658, %v872
        %v874 = vpop.f32.mrb[0].mxu0
        %v875 = vadd.f32 %v658, %v874
        %v876 = vpop.f32.mrb[0].mxu0
        %v877 = vadd.f32 %v663, %v876
        %v878 = vpop.f32.mrb[0].mxu0
        %v879 = vadd.f32 %v663, %v878
        %880 = vmatprep.mubr.bf16.mxu0 0
        %881 = vmatmul.mubr.bf16.gmra.mrb[0].mxu0 %v784
        %v882 = vpop.f32.mrb[0].mxu0
        %v883 = vadd.f32 %v668, %v882
        %v884 = vpop.f32.mrb[0].mxu0
        %v885 = vadd.f32 %v668, %v884
        %v886 = vpop.f32.mrb[0].mxu0
        %v887 = vadd.f32 %v673, %v886
        %v888 = vpop.f32.mrb[0].mxu0
        %v889 = vadd.f32 %v673, %v888
        %890 = vmatprep.mubr.bf16.mxu0 0
        %891 = vmatmul.mubr.bf16.gmra.mrb[0].mxu0 %v787
        %v892 = vpop.f32.mrb[0].mxu0
        %v893 = vadd.f32 %v678, %v892
        %v894 = vpop.f32.mrb[0].mxu0
        %v895 = vadd.f32 %v678, %v894
        %v896 = vpop.f32.mrb[0].mxu0
        %v897 = vadd.f32 %v683, %v896
        %v898 = vpop.f32.mrb[0].mxu0
        %v899 = vadd.f32 %v683, %v898
        %900 = vmatprep.mubr.bf16.mxu0 0
        %901 = vmatmul.mubr.bf16.gmra.mrb[0].mxu0 %v790
        %v902 = vpop.f32.mrb[0].mxu0
        %v903 = vadd.f32 %v688, %v902
        %v904 = vpop.f32.mrb[0].mxu0
        %v905 = vadd.f32 %v688, %v904
        %v906 = vpop.f32.mrb[0].mxu0
        %v907 = vadd.f32 %v693, %v906
        %v908 = vpop.f32.mrb[0].mxu0
        %v909 = vadd.f32 %v693, %v908
        %910 = vmatprep.mubr.bf16.mxu0 0
        %911 = vmatmul.mubr.bf16.gmra.mrb[0].mxu0 %v793
        %v912 = vpop.f32.mrb[0].mxu0
        %v913 = vadd.f32 %v698, %v912
        %v914 = vpop.f32.mrb[0].mxu0
        %v915 = vadd.f32 %v698, %v914
        %v916 = vpop.f32.mrb[0].mxu0
        %v917 = vadd.f32 %v703, %v916
        %v918 = vpop.f32.mrb[0].mxu0
        %v919 = vadd.f32 %v703, %v918
        %920 = vdwg.mxu0
        %921 = vmatprep.subr.bf16.mxu0 %v806
        %922 = vmatpush1.bf16.msra.mxu0 %v803
        %923 = vmatprep.subr.bf16.mxu0 0
        %924 = vmatpush1.bf16.msra.mxu0 0
        %925 = vmatprep.subr.bf16.mxu0 0
        %926 = vmatpush1.bf16.msra.mxu0 0
        %927 = vmatprep.subr.bf16.mxu0 0
        %928 = vmatpush1.bf16.msra.mxu0 0
        %929 = vmatprep.subr.bf16.mxu0 0
        %930 = vmatpush1.bf16.msra.mxu0 0
        %931 = vmatprep.subr.bf16.mxu0 0
        %932 = vmatpush1.bf16.msra.mxu0 0
        %933 = vmatprep.subr.bf16.mxu0 0
        %934 = vmatpush1.bf16.msra.mxu0 0
        %935 = vmatprep.subr.bf16.mxu0 0
        %936 = vmatpush1.bf16.msra.mxu0 0
        %937 = vmatprep.subr.bf16.mxu0 0
        %938 = vmatpush1.bf16.msra.mxu0 0
        %939 = vmatprep.subr.bf16.mxu0 0
        %940 = vmatpush1.bf16.msra.mxu0 0
        %941 = vmatprep.subr.bf16.mxu0 0
        %942 = vmatpush1.bf16.msra.mxu0 0
        %943 = vmatprep.subr.bf16.mxu0 0
        %944 = vmatpush1.bf16.msra.mxu0 0
        %945 = vmatprep.subr.bf16.mxu0 0
        %946 = vmatpush1.bf16.msra.mxu0 0
        %947 = vmatprep.subr.bf16.mxu0 0
        %948 = vmatpush1.bf16.msra.mxu0 0
        %949 = vmatprep.subr.bf16.mxu0 0
        %950 = vmatpush1.bf16.msra.mxu0 0
        %951 = vmatprep.subr.bf16.mxu0 0
        %952 = vmatpush1.bf16.msra.mxu0 0
        %953 = vmatprep.mubr.bf16.mxu0 0
        %954 = vmatmul.mubr.bf16.gmra.mrb[0].mxu0 %v772
        %v955 = vpop.f32.mrb[0].mxu0
        %v956 = vadd.f32 %v628, %v955
        %v957 = vpop.f32.mrb[0].mxu0
        %v958 = vadd.f32 %v628, %v957
        %v959 = vpop.f32.mrb[0].mxu0
        %v960 = vadd.f32 %v633, %v959
        %v961 = vpop.f32.mrb[0].mxu0
        %v962 = vadd.f32 %v633, %v961
        %963 = vmatprep.mubr.bf16.mxu0 0
        %964 = vmatmul.mubr.bf16.gmra.mrb[0].mxu0 %v775
        %v965 = vpop.f32.mrb[0].mxu0
        %v966 = vadd.f32 %v638, %v965
        %v967 = vpop.f32.mrb[0].mxu0
        %v968 = vadd.f32 %v638, %v967
        %v969 = vpop.f32.mrb[0].mxu0
        %v970 = vadd.f32 %v643, %v969
        %v971 = vpop.f32.mrb[0].mxu0
        %v972 = vadd.f32 %v643, %v971
        %973 = vmatprep.mubr.bf16.mxu0 0
        %974 = vmatmul.mubr.bf16.gmra.mrb[0].mxu0 %v778
        %v975 = vpop.f32.mrb[0].mxu0
        %v976 = vadd.f32 %v648, %v975
        %v977 = vpop.f32.mrb[0].mxu0
        %v978 = vadd.f32 %v648, %v977
        %v979 = vpop.f32.mrb[0].mxu0
        %v980 = vadd.f32 %v653, %v979
        %v981 = vpop.f32.mrb[0].mxu0
        %v982 = vadd.f32 %v653, %v981
        %983 = vmatprep.mubr.bf16.mxu0 0
        %984 = vmatmul.mubr.bf16.gmra.mrb[0].mxu0 %v781
        %v985 = vpop.f32.mrb[0].mxu0
        %v986 = vadd.f32 %v658, %v985
        %v987 = vpop.f32.mrb[0].mxu0
        %v988 = vadd.f32 %v658, %v987
        %v989 = vpop.f32.mrb[0].mxu0
        %v990 = vadd.f32 %v663, %v989
        %v991 = vpop.f32.mrb[0].mxu0
        %v992 = vadd.f32 %v663, %v991
        %993 = vmatprep.mubr.bf16.mxu0 0
        %994 = vmatmul.mubr.bf16.gmra.mrb[0].mxu0 %v784
        %v995 = vpop.f32.mrb[0].mxu0
        %v996 = vadd.f32 %v668, %v995
        %v997 = vpop.f32.mrb[0].mxu0
        %v998 = vadd.f32 %v668, %v997
        %v999 = vpop.f32.mrb[0].mxu0
        %v1000 = vadd.f32 %v673, %v999
        %v1001 = vpop.f32.mrb[0].mxu0
        %v1002 = vadd.f32 %v673, %v1001
        %1003 = vmatprep.mubr.bf16.mxu0 0
        %1004 = vmatmul.mubr.bf16.gmra.mrb[0].mxu0 %v787
        %v1005 = vpop.f32.mrb[0].mxu0
        %v1006 = vadd.f32 %v678, %v1005
        %v1007 = vpop.f32.mrb[0].mxu0
        %v1008 = vadd.f32 %v678, %v1007
        %v1009 = vpop.f32.mrb[0].mxu0
        %v1010 = vadd.f32 %v683, %v1009
        %v1011 = vpop.f32.mrb[0].mxu0
        %v1012 = vadd.f32 %v683, %v1011
        %1013 = vmatprep.mubr.bf16.mxu0 0
        %1014 = vmatmul.mubr.bf16.gmra.mrb[0].mxu0 %v790
        %v1015 = vpop.f32.mrb[0].mxu0
        %v1016 = vadd.f32 %v688, %v1015
        %v1017 = vpop.f32.mrb[0].mxu0
        %v1018 = vadd.f32 %v688, %v1017
        %v1019 = vpop.f32.mrb[0].mxu0
        %v1020 = vadd.f32 %v693, %v1019
        %v1021 = vpop.f32.mrb[0].mxu0
        %v1022 = vadd.f32 %v693, %v1021
        %1023 = vmatprep.mubr.bf16.mxu0 0
        %1024 = vmatmul.mubr.bf16.gmra.mrb[0].mxu0 %v793
        %v1025 = vpop.f32.mrb[0].mxu0
        %v1026 = vadd.f32 %v698, %v1025
        %v1027 = vpop.f32.mrb[0].mxu0
        %v1028 = vadd.f32 %v698, %v1027
        %v1029 = vpop.f32.mrb[0].mxu0
        %v1030 = vadd.f32 %v703, %v1029
        %v1031 = vpop.f32.mrb[0].mxu0
        %v1032 = vadd.f32 %v703, %v1031
        %1033 = vdwg.mxu0
        %v1034 = vmax.f32 %v843, 0.0
        %v1035 = vmax.f32 %v845, 0.0
        %v1036 = vmax.f32 %v956, 0.0
        %v1037 = vmax.f32 %v958, 0.0
        %v1038 = vmax.f32 %v847, 0.0
        %v1039 = vmax.f32 %v849, 0.0
        %v1040 = vmax.f32 %v960, 0.0
        %v1041 = vmax.f32 %v962, 0.0
        %v1042 = vmax.f32 %v853, 0.0
        %v1043 = vmax.f32 %v855, 0.0
        %v1044 = vmax.f32 %v966, 0.0
        %v1045 = vmax.f32 %v968, 0.0
        %v1046 = vmax.f32 %v857, 0.0
        %v1047 = vmax.f32 %v859, 0.0
        %v1048 = vmax.f32 %v970, 0.0
        %v1049 = vmax.f32 %v972, 0.0
        %v1050 = vmax.f32 %v863, 0.0
        %v1051 = vmax.f32 %v865, 0.0
        %v1052 = vmax.f32 %v976, 0.0
        %v1053 = vmax.f32 %v978, 0.0
        %v1054 = vmax.f32 %v867, 0.0
        %v1055 = vmax.f32 %v869, 0.0
        %v1056 = vmax.f32 %v980, 0.0
        %v1057 = vmax.f32 %v982, 0.0
        %v1058 = vmax.f32 %v873, 0.0
        %v1059 = vmax.f32 %v875, 0.0
        %v1060 = vmax.f32 %v986, 0.0
        %v1061 = vmax.f32 %v988, 0.0
        %v1062 = vmax.f32 %v877, 0.0
        %v1063 = vmax.f32 %v879, 0.0
        %v1064 = vmax.f32 %v990, 0.0
        %v1065 = vmax.f32 %v992, 0.0
        %v1066 = vmax.f32 %v883, 0.0
        %v1067 = vmax.f32 %v885, 0.0
        %v1068 = vmax.f32 %v996, 0.0
        %v1069 = vmax.f32 %v998, 0.0
        %v1070 = vmax.f32 %v887, 0.0
        %v1071 = vmax.f32 %v889, 0.0
        %v1072 = vmax.f32 %v1000, 0.0
        %v1073 = vmax.f32 %v1002, 0.0
        %v1074 = vmax.f32 %v893, 0.0
        %v1075 = vmax.f32 %v895, 0.0
        %v1076 = vmax.f32 %v1006, 0.0
        %v1077 = vmax.f32 %v1008, 0.0
        %v1078 = vmax.f32 %v897, 0.0
        %v1079 = vmax.f32 %v899, 0.0
        %v1080 = vmax.f32 %v1010, 0.0
        %v1081 = vmax.f32 %v1012, 0.0
        %v1082 = vmax.f32 %v903, 0.0
        %v1083 = vmax.f32 %v905, 0.0
        %v1084 = vmax.f32 %v1016, 0.0
        %v1085 = vmax.f32 %v1018, 0.0
        %v1086 = vmax.f32 %v907, 0.0
        %v1087 = vmax.f32 %v909, 0.0
        %v1088 = vmax.f32 %v1020, 0.0
        %v1089 = vmax.f32 %v1022, 0.0
        %v1090 = vmax.f32 %v913, 0.0
        %v1091 = vmax.f32 %v915, 0.0
        %v1092 = vmax.f32 %v1026, 0.0
        %v1093 = vmax.f32 %v1028, 0.0
        %v1094 = vmax.f32 %v917, 0.0
        %v1095 = vmax.f32 %v919, 0.0
        %v1096 = vmax.f32 %v1030, 0.0
        %v1097 = vmax.f32 %v1032, 0.0
        %v1098 = vld [vmem:[%s8] sm:$0xf]
        %v1099 = vld [vmem:[%s8 + $0x4] sm:$0xf]
        %v1100 = vld [vmem:[%s8 + $0x8] sm:$0xf]
        %v1101 = vld [vmem:[%s8 + $0xc] sm:$0xf]
        %v1102 = vld [vmem:[%s8 + $0x10] sm:$0xf]
        %v1103 = vld [vmem:[%s8 + $0x14] sm:$0xf]
        %v1104 = vld [vmem:[%s8 + $0x18] sm:$0xf]
        %v1105 = vld [vmem:[%s8 + $0x1c] sm:$0xf]
        %v1106 = vld [vmem:[%s8 + $0x20] sm:$0xf]
        %v1107 = vld [vmem:[%s8 + $0x24] sm:$0xf]
        %v1108 = vld [vmem:[%s8 + $0x28] sm:$0xf]
        %v1109 = vld [vmem:[%s8 + $0x2c] sm:$0xf]
        %v1110 = vld [vmem:[%s8 + $0x30] sm:$0xf]
        %v1111 = vld [vmem:[%s8 + $0x34] sm:$0xf]
        %v1112 = vld [vmem:[%s8 + $0x38] sm:$0xf]
        %v1113 = vld [vmem:[%s8 + $0x3c] sm:$0xf]
        %v1114 = vld [vmem:[#allocation8] sm:$0xff]
        %v1115 = vld [vmem:[#allocation8 + $0x8] sm:$0xff]
        %v1116 = vld [vmem:[#allocation8 + $0x10] sm:$0xff]
        %v1117 = vld [vmem:[#allocation8 + $0x18] sm:$0xff]
        %v1118 = vld [vmem:[#allocation8 + $0x20] sm:$0xff]
        %v1119 = vld [vmem:[#allocation8 + $0x28] sm:$0xff]
        %v1120 = vld [vmem:[#allocation8 + $0x30] sm:$0xff]
        %v1121 = vld [vmem:[#allocation8 + $0x38] sm:$0xff]
        %v1122 = vld [vmem:[#allocation8 + $0x40] sm:$0xff]
        %v1123 = vld [vmem:[#allocation8 + $0x48] sm:$0xff]
        %v1124 = vld [vmem:[#allocation8 + $0x50] sm:$0xff]
        %v1125 = vld [vmem:[#allocation8 + $0x58] sm:$0xff]
        %v1126 = vld [vmem:[#allocation8 + $0x60] sm:$0xff]
        %v1127 = vld [vmem:[#allocation8 + $0x68] sm:$0xff]
        %v1128 = vld [vmem:[#allocation8 + $0x70] sm:$0xff]
        %v1129 = vld [vmem:[#allocation8 + $0x78] sm:$0xff]
        %v1130 = vpack.c.bf16 %v1038, %v1034
        %v1131 = vpack.c.bf16 %v1039, %v1035
        %v1132 = vpack.c.bf16 %v1040, %v1036
        %v1133 = vpack.c.bf16 %v1041, %v1037
        %v1134 = vpack.c.bf16 %v1046, %v1042
        %v1135 = vpack.c.bf16 %v1047, %v1043
        %v1136 = vpack.c.bf16 %v1048, %v1044
        %v1137 = vpack.c.bf16 %v1049, %v1045
        %v1138 = vpack.c.bf16 %v1054, %v1050
        %v1139 = vpack.c.bf16 %v1055, %v1051
        %v1140 = vpack.c.bf16 %v1056, %v1052
        %v1141 = vpack.c.bf16 %v1057, %v1053
        %v1142 = vpack.c.bf16 %v1062, %v1058
        %v1143 = vpack.c.bf16 %v1063, %v1059
        %v1144 = vpack.c.bf16 %v1064, %v1060
        %v1145 = vpack.c.bf16 %v1065, %v1061
        %v1146 = vpack.c.bf16 %v1070, %v1066
        %v1147 = vpack.c.bf16 %v1071, %v1067
        %v1148 = vpack.c.bf16 %v1072, %v1068
        %v1149 = vpack.c.bf16 %v1073, %v1069
        %v1150 = vpack.c.bf16 %v1078, %v1074
        %v1151 = vpack.c.bf16 %v1079, %v1075
        %v1152 = vpack.c.bf16 %v1080, %v1076
        %v1153 = vpack.c.bf16 %v1081, %v1077
        %v1154 = vpack.c.bf16 %v1086, %v1082
        %v1155 = vpack.c.bf16 %v1087, %v1083
        %v1156 = vpack.c.bf16 %v1088, %v1084
        %v1157 = vpack.c.bf16 %v1089, %v1085
        %v1158 = vpack.c.bf16 %v1094, %v1090
        %v1159 = vpack.c.bf16 %v1095, %v1091
        %v1160 = vpack.c.bf16 %v1096, %v1092
        %v1161 = vpack.c.bf16 %v1097, %v1093
        %1163 = vset.pattern.permute.xlu0 0
        %1164 = vperm.xlu0 %1163, %v1114
        %v1165 = vpop.permute.xlu0 %1164
        %1168 = vset.pattern.permute.xlu0 0
        %1169 = vperm.xlu0 %1168, %v1115
        %v1170 = vpop.permute.xlu0 %1169
        %1173 = vset.pattern.permute.xlu0 0
        %1174 = vperm.xlu0 %1173, %v1116
        %v1175 = vpop.permute.xlu0 %1174
        %1178 = vset.pattern.permute.xlu0 0
        %1179 = vperm.xlu0 %1178, %v1117
        %v1180 = vpop.permute.xlu0 %1179
        %1183 = vset.pattern.permute.xlu0 0
        %1184 = vperm.xlu0 %1183, %v1118
        %v1185 = vpop.permute.xlu0 %1184
        %1188 = vset.pattern.permute.xlu0 0
        %1189 = vperm.xlu0 %1188, %v1119
        %v1190 = vpop.permute.xlu0 %1189
        %1193 = vset.pattern.permute.xlu0 0
        %1194 = vperm.xlu0 %1193, %v1120
        %v1195 = vpop.permute.xlu0 %1194
        %1198 = vset.pattern.permute.xlu0 0
        %1199 = vperm.xlu0 %1198, %v1121
        %v1200 = vpop.permute.xlu0 %1199
        %1203 = vset.pattern.permute.xlu0 0
        %1204 = vperm.xlu0 %1203, %v1122
        %v1205 = vpop.permute.xlu0 %1204
        %1208 = vset.pattern.permute.xlu0 0
        %1209 = vperm.xlu0 %1208, %v1123
        %v1210 = vpop.permute.xlu0 %1209
        %1213 = vset.pattern.permute.xlu0 0
        %1214 = vperm.xlu0 %1213, %v1124
        %v1215 = vpop.permute.xlu0 %1214
        %1218 = vset.pattern.permute.xlu0 0
        %1219 = vperm.xlu0 %1218, %v1125
        %v1220 = vpop.permute.xlu0 %1219
        %1223 = vset.pattern.permute.xlu0 0
        %1224 = vperm.xlu0 %1223, %v1126
        %v1225 = vpop.permute.xlu0 %1224
        %1228 = vset.pattern.permute.xlu0 0
        %1229 = vperm.xlu0 %1228, %v1127
        %v1230 = vpop.permute.xlu0 %1229
        %1233 = vset.pattern.permute.xlu0 0
        %1234 = vperm.xlu0 %1233, %v1128
        %v1235 = vpop.permute.xlu0 %1234
        %1238 = vset.pattern.permute.xlu0 0
        %1239 = vperm.xlu0 %1238, %v1129
        %v1240 = vpop.permute.xlu0 %1239
        %v1258 = vunpack.c.l.b16 %v1098
        %v1259 = vunpack.c.l.b16 %v1099
        %v1260 = vunpack.c.l.b16 %v1100
        %v1261 = vunpack.c.l.b16 %v1101
        %v1262 = vunpack.c.l.b16 %v1102
        %v1263 = vunpack.c.l.b16 %v1103
        %v1264 = vunpack.c.l.b16 %v1104
        %v1265 = vunpack.c.l.b16 %v1105
        %v1266 = vunpack.c.l.b16 %v1106
        %v1267 = vunpack.c.l.b16 %v1107
        %v1268 = vunpack.c.l.b16 %v1108
        %v1269 = vunpack.c.l.b16 %v1109
        %v1270 = vunpack.c.l.b16 %v1110
        %v1271 = vunpack.c.l.b16 %v1111
        %v1272 = vunpack.c.l.b16 %v1112
        %v1273 = vunpack.c.l.b16 %v1113
        %v1274 = vpack.c.b16 %v1259, %v1258
        %v1275 = vpack.c.b16 %v1261, %v1260
        %v1276 = vpack.c.b16 %v1263, %v1262
        %v1277 = vpack.c.b16 %v1265, %v1264
        %v1278 = vpack.c.b16 %v1267, %v1266
        %v1279 = vpack.c.b16 %v1269, %v1268
        %v1280 = vpack.c.b16 %v1271, %v1270
        %v1281 = vpack.c.b16 %v1273, %v1272
        %1290 = vmatprep.subr.bf16.mxu0 %v1131
        %1291 = vmatpush1.bf16.msra.mxu0 %v1130
        %1292 = vmatprep.subr.bf16.mxu0 %v1135
        %1293 = vmatpush1.bf16.msra.mxu0 %v1134
        %1294 = vmatprep.subr.bf16.mxu0 %v1139
        %1295 = vmatpush1.bf16.msra.mxu0 %v1138
        %1296 = vmatprep.subr.bf16.mxu0 %v1143
        %1297 = vmatpush1.bf16.msra.mxu0 %v1142
        %1298 = vmatprep.subr.bf16.mxu0 %v1147
        %1299 = vmatpush1.bf16.msra.mxu0 %v1146
        %1300 = vmatprep.subr.bf16.mxu0 %v1151
        %1301 = vmatpush1.bf16.msra.mxu0 %v1150
        %1302 = vmatprep.subr.bf16.mxu0 %v1155
        %1303 = vmatpush1.bf16.msra.mxu0 %v1154
        %1304 = vmatprep.subr.bf16.mxu0 %v1159
        %1305 = vmatpush1.bf16.msra.mxu0 %v1158
        %1306 = vmatprep.subr.bf16.mxu0 0
        %1307 = vmatpush1.bf16.msra.mxu0 0
        %1308 = vmatprep.subr.bf16.mxu0 0
        %1309 = vmatpush1.bf16.msra.mxu0 0
        %1310 = vmatprep.subr.bf16.mxu0 0
        %1311 = vmatpush1.bf16.msra.mxu0 0
        %1312 = vmatprep.subr.bf16.mxu0 0
        %1313 = vmatpush1.bf16.msra.mxu0 0
        %1314 = vmatprep.subr.bf16.mxu0 0
        %1315 = vmatpush1.bf16.msra.mxu0 0
        %1316 = vmatprep.subr.bf16.mxu0 0
        %1317 = vmatpush1.bf16.msra.mxu0 0
        %1318 = vmatprep.subr.bf16.mxu0 0
        %1319 = vmatpush1.bf16.msra.mxu0 0
        %1320 = vmatprep.subr.bf16.mxu0 0
        %1321 = vmatpush1.bf16.msra.mxu0 0
        %1322 = vmatprep.mubr.bf16.mxu0 0
        %1323 = vmatmul.mubr.bf16.gmra.mrb[0].mxu0 %v1274
        %v1324 = vpop.f32.mrb[0].mxu0
        %v1325 = vadd.f32 %v1165, %v1324
        %v1326 = vpop.f32.mrb[0].mxu0
        %v1327 = vadd.f32 %v1165, %v1326
        %v1328 = vpop.f32.mrb[0].mxu0
        %v1329 = vadd.f32 %v1170, %v1328
        %v1330 = vpop.f32.mrb[0].mxu0
        %v1331 = vadd.f32 %v1170, %v1330
        %1332 = vmatprep.mubr.bf16.mxu0 0
        %1333 = vmatmul.mubr.bf16.gmra.mrb[0].mxu0 %v1275
        %v1334 = vpop.f32.mrb[0].mxu0
        %v1335 = vadd.f32 %v1175, %v1334
        %v1336 = vpop.f32.mrb[0].mxu0
        %v1337 = vadd.f32 %v1175, %v1336
        %v1338 = vpop.f32.mrb[0].mxu0
        %v1339 = vadd.f32 %v1180, %v1338
        %v1340 = vpop.f32.mrb[0].mxu0
        %v1341 = vadd.f32 %v1180, %v1340
        %1342 = vmatprep.mubr.bf16.mxu0 0
        %1343 = vmatmul.mubr.bf16.gmra.mrb[0].mxu0 %v1276
        %v1344 = vpop.f32.mrb[0].mxu0
        %v1345 = vadd.f32 %v1185, %v1344
        %v1346 = vpop.f32.mrb[0].mxu0
        %v1347 = vadd.f32 %v1185, %v1346
        %v1348 = vpop.f32.mrb[0].mxu0
        %v1349 = vadd.f32 %v1190, %v1348
        %v1350 = vpop.f32.mrb[0].mxu0
        %v1351 = vadd.f32 %v1190, %v1350
        %1352 = vmatprep.mubr.bf16.mxu0 0
        %1353 = vmatmul.mubr.bf16.gmra.mrb[0].mxu0 %v1277
        %v1354 = vpop.f32.mrb[0].mxu0
        %v1355 = vadd.f32 %v1195, %v1354
        %v1356 = vpop.f32.mrb[0].mxu0
        %v1357 = vadd.f32 %v1195, %v1356
        %v1358 = vpop.f32.mrb[0].mxu0
        %v1359 = vadd.f32 %v1200, %v1358
        %v1360 = vpop.f32.mrb[0].mxu0
        %v1361 = vadd.f32 %v1200, %v1360
        %1362 = vmatprep.mubr.bf16.mxu0 0
        %1363 = vmatmul.mubr.bf16.gmra.mrb[0].mxu0 %v1278
        %v1364 = vpop.f32.mrb[0].mxu0
        %v1365 = vadd.f32 %v1205, %v1364
        %v1366 = vpop.f32.mrb[0].mxu0
        %v1367 = vadd.f32 %v1205, %v1366
        %v1368 = vpop.f32.mrb[0].mxu0
        %v1369 = vadd.f32 %v1210, %v1368
        %v1370 = vpop.f32.mrb[0].mxu0
        %v1371 = vadd.f32 %v1210, %v1370
        %1372 = vmatprep.mubr.bf16.mxu0 0
        %1373 = vmatmul.mubr.bf16.gmra.mrb[0].mxu0 %v1279
        %v1374 = vpop.f32.mrb[0].mxu0
        %v1375 = vadd.f32 %v1215, %v1374
        %v1376 = vpop.f32.mrb[0].mxu0
        %v1377 = vadd.f32 %v1215, %v1376
        %v1378 = vpop.f32.mrb[0].mxu0
        %v1379 = vadd.f32 %v1220, %v1378
        %v1380 = vpop.f32.mrb[0].mxu0
        %v1381 = vadd.f32 %v1220, %v1380
        %1382 = vmatprep.mubr.bf16.mxu0 0
        %1383 = vmatmul.mubr.bf16.gmra.mrb[0].mxu0 %v1280
        %v1384 = vpop.f32.mrb[0].mxu0
        %v1385 = vadd.f32 %v1225, %v1384
        %v1386 = vpop.f32.mrb[0].mxu0
        %v1387 = vadd.f32 %v1225, %v1386
        %v1388 = vpop.f32.mrb[0].mxu0
        %v1389 = vadd.f32 %v1230, %v1388
        %v1390 = vpop.f32.mrb[0].mxu0
        %v1391 = vadd.f32 %v1230, %v1390
        %1392 = vmatprep.mubr.bf16.mxu0 0
        %1393 = vmatmul.mubr.bf16.gmra.mrb[0].mxu0 %v1281
        %v1394 = vpop.f32.mrb[0].mxu0
        %v1395 = vadd.f32 %v1235, %v1394
        %v1396 = vpop.f32.mrb[0].mxu0
        %v1397 = vadd.f32 %v1235, %v1396
        %v1398 = vpop.f32.mrb[0].mxu0
        %v1399 = vadd.f32 %v1240, %v1398
        %v1400 = vpop.f32.mrb[0].mxu0
        %v1401 = vadd.f32 %v1240, %v1400
        %1402 = vdwg.mxu0
        %1403 = vmatprep.subr.bf16.mxu0 %v1133
        %1404 = vmatpush1.bf16.msra.mxu0 %v1132
        %1405 = vmatprep.subr.bf16.mxu0 %v1137
        %1406 = vmatpush1.bf16.msra.mxu0 %v1136
        %1407 = vmatprep.subr.bf16.mxu0 %v1141
        %1408 = vmatpush1.bf16.msra.mxu0 %v1140
        %1409 = vmatprep.subr.bf16.mxu0 %v1145
        %1410 = vmatpush1.bf16.msra.mxu0 %v1144
        %1411 = vmatprep.subr.bf16.mxu0 %v1149
        %1412 = vmatpush1.bf16.msra.mxu0 %v1148
        %1413 = vmatprep.subr.bf16.mxu0 %v1153
        %1414 = vmatpush1.bf16.msra.mxu0 %v1152
        %1415 = vmatprep.subr.bf16.mxu0 %v1157
        %1416 = vmatpush1.bf16.msra.mxu0 %v1156
        %1417 = vmatprep.subr.bf16.mxu0 %v1161
        %1418 = vmatpush1.bf16.msra.mxu0 %v1160
        %1419 = vmatprep.subr.bf16.mxu0 0
        %1420 = vmatpush1.bf16.msra.mxu0 0
        %1421 = vmatprep.subr.bf16.mxu0 0
        %1422 = vmatpush1.bf16.msra.mxu0 0
        %1423 = vmatprep.subr.bf16.mxu0 0
        %1424 = vmatpush1.bf16.msra.mxu0 0
        %1425 = vmatprep.subr.bf16.mxu0 0
        %1426 = vmatpush1.bf16.msra.mxu0 0
        %1427 = vmatprep.subr.bf16.mxu0 0
        %1428 = vmatpush1.bf16.msra.mxu0 0
        %1429 = vmatprep.subr.bf16.mxu0 0
        %1430 = vmatpush1.bf16.msra.mxu0 0
        %1431 = vmatprep.subr.bf16.mxu0 0
        %1432 = vmatpush1.bf16.msra.mxu0 0
        %1433 = vmatprep.subr.bf16.mxu0 0
        %1434 = vmatpush1.bf16.msra.mxu0 0
        %1435 = vmatprep.mubr.bf16.mxu0 0
        %1436 = vmatmul.mubr.bf16.gmra.mrb[0].mxu0 %v1274
        %v1437 = vpop.f32.mrb[0].mxu0
        %v1438 = vadd.f32 %v1165, %v1437
        %v1439 = vpop.f32.mrb[0].mxu0
        %v1440 = vadd.f32 %v1165, %v1439
        %v1441 = vpop.f32.mrb[0].mxu0
        %v1442 = vadd.f32 %v1170, %v1441
        %v1443 = vpop.f32.mrb[0].mxu0
        %v1444 = vadd.f32 %v1170, %v1443
        %1445 = vmatprep.mubr.bf16.mxu0 0
        %1446 = vmatmul.mubr.bf16.gmra.mrb[0].mxu0 %v1275
        %v1447 = vpop.f32.mrb[0].mxu0
        %v1448 = vadd.f32 %v1175, %v1447
        %v1449 = vpop.f32.mrb[0].mxu0
        %v1450 = vadd.f32 %v1175, %v1449
        %v1451 = vpop.f32.mrb[0].mxu0
        %v1452 = vadd.f32 %v1180, %v1451
        %v1453 = vpop.f32.mrb[0].mxu0
        %v1454 = vadd.f32 %v1180, %v1453
        %1455 = vmatprep.mubr.bf16.mxu0 0
        %1456 = vmatmul.mubr.bf16.gmra.mrb[0].mxu0 %v1276
        %v1457 = vpop.f32.mrb[0].mxu0
        %v1458 = vadd.f32 %v1185, %v1457
        %v1459 = vpop.f32.mrb[0].mxu0
        %v1460 = vadd.f32 %v1185, %v1459
        %v1461 = vpop.f32.mrb[0].mxu0
        %v1462 = vadd.f32 %v1190, %v1461
        %v1463 = vpop.f32.mrb[0].mxu0
        %v1464 = vadd.f32 %v1190, %v1463
        %1465 = vmatprep.mubr.bf16.mxu0 0
        %1466 = vmatmul.mubr.bf16.gmra.mrb[0].mxu0 %v1277
        %v1467 = vpop.f32.mrb[0].mxu0
        %v1468 = vadd.f32 %v1195, %v1467
        %v1469 = vpop.f32.mrb[0].mxu0
        %v1470 = vadd.f32 %v1195, %v1469
        %v1471 = vpop.f32.mrb[0].mxu0
        %v1472 = vadd.f32 %v1200, %v1471
        %v1473 = vpop.f32.mrb[0].mxu0
        %v1474 = vadd.f32 %v1200, %v1473
        %1475 = vmatprep.mubr.bf16.mxu0 0
        %1476 = vmatmul.mubr.bf16.gmra.mrb[0].mxu0 %v1278
        %v1477 = vpop.f32.mrb[0].mxu0
        %v1478 = vadd.f32 %v1205, %v1477
        %v1479 = vpop.f32.mrb[0].mxu0
        %v1480 = vadd.f32 %v1205, %v1479
        %v1481 = vpop.f32.mrb[0].mxu0
        %v1482 = vadd.f32 %v1210, %v1481
        %v1483 = vpop.f32.mrb[0].mxu0
        %v1484 = vadd.f32 %v1210, %v1483
        %1485 = vmatprep.mubr.bf16.mxu0 0
        %1486 = vmatmul.mubr.bf16.gmra.mrb[0].mxu0 %v1279
        %v1487 = vpop.f32.mrb[0].mxu0
        %v1488 = vadd.f32 %v1215, %v1487
        %v1489 = vpop.f32.mrb[0].mxu0
        %v1490 = vadd.f32 %v1215, %v1489
        %v1491 = vpop.f32.mrb[0].mxu0
        %v1492 = vadd.f32 %v1220, %v1491
        %v1493 = vpop.f32.mrb[0].mxu0
        %v1494 = vadd.f32 %v1220, %v1493
        %1495 = vmatprep.mubr.bf16.mxu0 0
        %1496 = vmatmul.mubr.bf16.gmra.mrb[0].mxu0 %v1280
        %v1497 = vpop.f32.mrb[0].mxu0
        %v1498 = vadd.f32 %v1225, %v1497
        %v1499 = vpop.f32.mrb[0].mxu0
        %v1500 = vadd.f32 %v1225, %v1499
        %v1501 = vpop.f32.mrb[0].mxu0
        %v1502 = vadd.f32 %v1230, %v1501
        %v1503 = vpop.f32.mrb[0].mxu0
        %v1504 = vadd.f32 %v1230, %v1503
        %1505 = vmatprep.mubr.bf16.mxu0 0
        %1506 = vmatmul.mubr.bf16.gmra.mrb[0].mxu0 %v1281
        %v1507 = vpop.f32.mrb[0].mxu0
        %v1508 = vadd.f32 %v1235, %v1507
        %v1509 = vpop.f32.mrb[0].mxu0
        %v1510 = vadd.f32 %v1235, %v1509
        %v1511 = vpop.f32.mrb[0].mxu0
        %v1512 = vadd.f32 %v1240, %v1511
        %v1513 = vpop.f32.mrb[0].mxu0
        %v1514 = vadd.f32 %v1240, %v1513
        %1515 = vdwg.mxu0
        %v1516 = vtanh.pop %v1325
        %v1517 = vtanh.pop %v1327
        %v1518 = vtanh.pop %v1438
        %v1519 = vtanh.pop %v1440
        %v1520 = vtanh.pop %v1329
        %v1521 = vtanh.pop %v1331
        %v1522 = vtanh.pop %v1442
        %v1523 = vtanh.pop %v1444
        %v1524 = vtanh.pop %v1335
        %v1525 = vtanh.pop %v1337
        %v1526 = vtanh.pop %v1448
        %v1527 = vtanh.pop %v1450
        %v1528 = vtanh.pop %v1339
        %v1529 = vtanh.pop %v1341
        %v1530 = vtanh.pop %v1452
        %v1531 = vtanh.pop %v1454
        %v1532 = vtanh.pop %v1345
        %v1533 = vtanh.pop %v1347
        %v1534 = vtanh.pop %v1458
        %v1535 = vtanh.pop %v1460
        %v1536 = vtanh.pop %v1349
        %v1537 = vtanh.pop %v1351
        %v1538 = vtanh.pop %v1462
        %v1539 = vtanh.pop %v1464
        %v1540 = vtanh.pop %v1355
        %v1541 = vtanh.pop %v1357
        %v1542 = vtanh.pop %v1468
        %v1543 = vtanh.pop %v1470
        %v1544 = vtanh.pop %v1359
        %v1545 = vtanh.pop %v1361
        %v1546 = vtanh.pop %v1472
        %v1547 = vtanh.pop %v1474
        %v1548 = vtanh.pop %v1365
        %v1549 = vtanh.pop %v1367
        %v1550 = vtanh.pop %v1478
        %v1551 = vtanh.pop %v1480
        %v1552 = vtanh.pop %v1369
        %v1553 = vtanh.pop %v1371
        %v1554 = vtanh.pop %v1482
        %v1555 = vtanh.pop %v1484
        %v1556 = vtanh.pop %v1375
        %v1557 = vtanh.pop %v1377
        %v1558 = vtanh.pop %v1488
        %v1559 = vtanh.pop %v1490
        %v1560 = vtanh.pop %v1379
        %v1561 = vtanh.pop %v1381
        %v1562 = vtanh.pop %v1492
        %v1563 = vtanh.pop %v1494
        %v1564 = vtanh.pop %v1385
        %v1565 = vtanh.pop %v1387
        %v1566 = vtanh.pop %v1498
        %v1567 = vtanh.pop %v1500
        %v1568 = vtanh.pop %v1389
        %v1569 = vtanh.pop %v1391
        %v1570 = vtanh.pop %v1502
        %v1571 = vtanh.pop %v1504
        %v1572 = vtanh.pop %v1395
        %v1573 = vtanh.pop %v1397
        %v1574 = vtanh.pop %v1508
        %v1575 = vtanh.pop %v1510
        %v1576 = vtanh.pop %v1399
        %v1577 = vtanh.pop %v1401
        %v1578 = vtanh.pop %v1512
        %v1579 = vtanh.pop %v1514
        %v1580 = vpack.c.bf16 %v591, %v591
        %v1581 = vpack.c.bf16 %v1520, %v1516
        %v1582 = vpack.c.bf16 %v1521, %v1517
        %v1583 = vpack.c.bf16 %v1522, %v1518
        %v1584 = vpack.c.bf16 %v1523, %v1519
        %v1585 = vpack.c.bf16 %v1528, %v1524
        %v1586 = vpack.c.bf16 %v1529, %v1525
        %v1587 = vpack.c.bf16 %v1530, %v1526
        %v1588 = vpack.c.bf16 %v1531, %v1527
        %v1589 = vpack.c.bf16 %v1536, %v1532
        %v1590 = vpack.c.bf16 %v1537, %v1533
        %v1591 = vpack.c.bf16 %v1538, %v1534
        %v1592 = vpack.c.bf16 %v1539, %v1535
        %v1593 = vpack.c.bf16 %v1544, %v1540
        %v1594 = vpack.c.bf16 %v1545, %v1541
        %v1595 = vpack.c.bf16 %v1546, %v1542
        %v1596 = vpack.c.bf16 %v1547, %v1543
        %v1597 = vpack.c.bf16 %v1552, %v1548
        %v1598 = vpack.c.bf16 %v1553, %v1549
        %v1599 = vpack.c.bf16 %v1554, %v1550
        %v1600 = vpack.c.bf16 %v1555, %v1551
        %v1601 = vpack.c.bf16 %v1560, %v1556
        %v1602 = vpack.c.bf16 %v1561, %v1557
        %v1603 = vpack.c.bf16 %v1562, %v1558
        %v1604 = vpack.c.bf16 %v1563, %v1559
        %v1605 = vpack.c.bf16 %v1568, %v1564
        %v1606 = vpack.c.bf16 %v1569, %v1565
        %v1607 = vpack.c.bf16 %v1570, %v1566
        %v1608 = vpack.c.bf16 %v1571, %v1567
        %v1609 = vpack.c.bf16 %v1576, %v1572
        %v1610 = vpack.c.bf16 %v1577, %v1573
        %v1611 = vpack.c.bf16 %v1578, %v1574
        %v1612 = vpack.c.bf16 %v1579, %v1575
        %1613 = vmatprep.subr.bf16.mxu0 %v1582
        %1614 = vmatpush1.bf16.msra.mxu0 %v1581
        %1615 = vmatprep.subr.bf16.mxu0 %v1586
        %1616 = vmatpush1.bf16.msra.mxu0 %v1585
        %1617 = vmatprep.subr.bf16.mxu0 %v1590
        %1618 = vmatpush1.bf16.msra.mxu0 %v1589
        %1619 = vmatprep.subr.bf16.mxu0 %v1594
        %1620 = vmatpush1.bf16.msra.mxu0 %v1593
        %1621 = vmatprep.subr.bf16.mxu0 %v1598
        %1622 = vmatpush1.bf16.msra.mxu0 %v1597
        %1623 = vmatprep.subr.bf16.mxu0 %v1602
        %1624 = vmatpush1.bf16.msra.mxu0 %v1601
        %1625 = vmatprep.subr.bf16.mxu0 %v1606
        %1626 = vmatpush1.bf16.msra.mxu0 %v1605
        %1627 = vmatprep.subr.bf16.mxu0 %v1610
        %1628 = vmatpush1.bf16.msra.mxu0 %v1609
        %1629 = vmatprep.subr.bf16.mxu0 0
        %1630 = vmatpush1.bf16.msra.mxu0 0
        %1631 = vmatprep.subr.bf16.mxu0 0
        %1632 = vmatpush1.bf16.msra.mxu0 0
        %1633 = vmatprep.subr.bf16.mxu0 0
        %1634 = vmatpush1.bf16.msra.mxu0 0
        %1635 = vmatprep.subr.bf16.mxu0 0
        %1636 = vmatpush1.bf16.msra.mxu0 0
        %1637 = vmatprep.subr.bf16.mxu0 0
        %1638 = vmatpush1.bf16.msra.mxu0 0
        %1639 = vmatprep.subr.bf16.mxu0 0
        %1640 = vmatpush1.bf16.msra.mxu0 0
        %1641 = vmatprep.subr.bf16.mxu0 0
        %1642 = vmatpush1.bf16.msra.mxu0 0
        %1643 = vmatprep.subr.bf16.mxu0 0
        %1644 = vmatpush1.bf16.msra.mxu0 0
        %1645 = vmatprep.mubr.bf16.mxu0 0
        %1646 = vmatmul.mubr.bf16.gmra.mrb[0].mxu0 %v1580
        %v1647 = vpop.f32.mrb[0].mxu0
        %v1648 = vadd.f32 0.0, %v1647
        %v1649 = vpop.f32.mrb[0].mxu0
        %v1650 = vadd.f32 0.0, %v1649
        %v1651 = vpop.f32.mrb[0].mxu0
        %v1652 = vpop.f32.mrb[0].mxu0
        %1653 = vdwg.mxu0
        %1654 = vmatprep.subr.bf16.mxu0 %v1584
        %1655 = vmatpush1.bf16.msra.mxu0 %v1583
        %1656 = vmatprep.subr.bf16.mxu0 %v1588
        %1657 = vmatpush1.bf16.msra.mxu0 %v1587
        %1658 = vmatprep.subr.bf16.mxu0 %v1592
        %1659 = vmatpush1.bf16.msra.mxu0 %v1591
        %1660 = vmatprep.subr.bf16.mxu0 %v1596
        %1661 = vmatpush1.bf16.msra.mxu0 %v1595
        %1662 = vmatprep.subr.bf16.mxu0 %v1600
        %1663 = vmatpush1.bf16.msra.mxu0 %v1599
        %1664 = vmatprep.subr.bf16.mxu0 %v1604
        %1665 = vmatpush1.bf16.msra.mxu0 %v1603
        %1666 = vmatprep.subr.bf16.mxu0 %v1608
        %1667 = vmatpush1.bf16.msra.mxu0 %v1607
        %1668 = vmatprep.subr.bf16.mxu0 %v1612
        %1669 = vmatpush1.bf16.msra.mxu0 %v1611
        %1670 = vmatprep.subr.bf16.mxu0 0
        %1671 = vmatpush1.bf16.msra.mxu0 0
        %1672 = vmatprep.subr.bf16.mxu0 0
        %1673 = vmatpush1.bf16.msra.mxu0 0
        %1674 = vmatprep.subr.bf16.mxu0 0
        %1675 = vmatpush1.bf16.msra.mxu0 0
        %1676 = vmatprep.subr.bf16.mxu0 0
        %1677 = vmatpush1.bf16.msra.mxu0 0
        %1678 = vmatprep.subr.bf16.mxu0 0
        %1679 = vmatpush1.bf16.msra.mxu0 0
        %1680 = vmatprep.subr.bf16.mxu0 0
        %1681 = vmatpush1.bf16.msra.mxu0 0
        %1682 = vmatprep.subr.bf16.mxu0 0
        %1683 = vmatpush1.bf16.msra.mxu0 0
        %1684 = vmatprep.subr.bf16.mxu0 0
        %1685 = vmatpush1.bf16.msra.mxu0 0
        %1686 = vmatprep.mubr.bf16.mxu0 0
        %1687 = vmatmul.mubr.bf16.gmra.mrb[0].mxu0 %v1580
        %v1688 = vpop.f32.mrb[0].mxu0
        %v1689 = vadd.f32 0.0, %v1688
        %v1690 = vpop.f32.mrb[0].mxu0
        %v1691 = vadd.f32 0.0, %v1690
        %v1692 = vpop.f32.mrb[0].mxu0
        %v1693 = vpop.f32.mrb[0].mxu0
        %1694 = vdwg.mxu0
        %1695 = vst [vmem:[%s410] sm:$0xff] %v1648
        %1696 = vst [vmem:[%s410 + $0x8] sm:$0xff] %v1650
        %1697 = vst [vmem:[%s410 + $0x10] sm:$0xff] %v1689
        %1698 = vst [vmem:[%s410 + $0x18] sm:$0xff] %v1691
        %s1699 = sand.u32 %s250, 1
        %s1700 = scalar_lea.sflag [#allocation4], %s1699
        %s1701 = sand.u32 %s250, 1
        %s1702 = smul.addr %s1701, 32
        %s1703 = scalar_lea.vmem [#allocation10], %s1702
        // Predicated region
        $region77: #{forward.1} parent=59 // pred_check
          %p1704 = pneg %p260
        $region78: #{forward.1} parent=59 // pred_check_branch
          %1706 = sbr.rel (%p1704) target = $region80
        $region79: #{forward.1} parent=59 // pred_region
          %s1707 = smul.u32 4, %s27
          %s1709 = ssub.s32 512, 512
          %1710 = vsyncadd %s1700, %s1709
          %s1711 = smul.addr %s1707, 128
          %s1712 = scalar_lea.hbm %s10, %s1711
          %s1714 = sshll.u32 %s1703, 4
          %s1715 = int_to_ptr.vmem [resolvable:$true] %s1714
          %1717 = dma.vmem_to_hbm [thread:$0]  %s1715, 512, %s1712, %s1700
        $region80: #{forward.1} parent=59 // pred_fallthru
          _
      $region60: #{forward.1} parent=5 // pred_fallthru
        _
      %p1718 = scmp.le.s32.totalorder 2, %s22
      // Predicated region
      $region81: #{forward.1} parent=5 // pred_check
        %p1719 = pneg %p1718
      $region82: #{forward.1} parent=5 // pred_check_branch
        %1721 = sbr.rel (%p1719) target = $region84
      $region83: #{forward.1} parent=5 // pred_region
        %s1722 = ssub.s32 %s22, 2
        // Predicated region
        $region85: #{forward.1} parent=83 // pred_check
          %p1723 = pneg %p266
        $region86: #{forward.1} parent=83 // pred_check_branch
          %1725 = sbr.rel (%p1723) target = $region88
        $region87: #{forward.1} parent=83 // pred_region
          %s1726 = sand.u32 %s251, 1
          %s1727 = scalar_lea.sflag [#allocation4], %s1726
          %s1728 = sand.u32 %s251, 1
          %s1729 = smul.addr %s1728, 32
          %s1730 = scalar_lea.vmem [#allocation10], %s1729
          %1731 = dma.done %s1727, 512
        $region88: #{forward.1} parent=83 // pred_fallthru
          _
      $region84: #{forward.1} parent=5 // pred_fallthru
        _
    $region6: #{forward.1} parent=1 // loop_footer
      %s26 = sadd.s32 1, %s22
    $region7: #{forward.1} parent=1 // loop_footer_branch
      %21 = sbr.rel target = $region3
    $region8: #{forward.1} parent=1 // loop_exit
      _
    %1732 = vsyncpa [#allocation3], 1
    %s1733 = scalar_lea.sflag [#allocation3], 1
    %1734 = vsyncpa %s1733, 1
    %1735 = vsyncpa [#allocation6], 1
    %1736 = vsyncpa [#allocation9], 1
    %1737 = vsyncpa [#allocation4], 1
    %s1738 = scalar_lea.sflag [#allocation4], 1
    %1739 = vsyncpa %s1738, 1

</llo_original>
